<compile_context>
chip_gen: v5e
topology: v5e:2x2
jax: 0.10.0
libtpu: 0.0.40
codegen_flags: <defaults>
</compile_context>

<pallas_src>
import functools
import math

import numpy as np
import jax
import jax.numpy as jnp
from jax.experimental import pallas as pl
from jax.experimental.pallas import tpu as pltpu  # noqa: F401  (TPU backend)


# --------------------------------------------------------------------------
# Fused kernel: conv1 -> conv2 -> conv3 -> fc1 -> fc2 (all ReLUs in-kernel).
# All intermediates live in vregs; only the (n, 128) result is stored.
# --------------------------------------------------------------------------
def _a3c_fused_kernel(p_ref, w1_ref, b1_ref, w2_ref, b2_ref, w3_ref, b3_ref,
                      wf1_ref, bf1_ref, wf2_ref, bf2_ref, out_ref,
                      *, n, blk, n_off2, n_off3):
    f32 = jnp.float32
    bf16 = jnp.bfloat16

    # conv1: one matmul over all (conv2-offset, conv2-position, batch) patch
    # rows.  Rows are grouped into n_off2 blocks of `blk` (8-aligned) rows.
    h1 = jnp.dot(p_ref[...], w1_ref[...], preferred_element_type=f32)
    h1 = jnp.maximum(h1 + b1_ref[...], 0.0)              # (n_off2*blk, 32)

    # conv2: its im2col block is a lane-concat of the 16 aligned row blocks
    # (block ij already holds conv1 activations at positions (2p+i, 2q+j)).
    col2 = jnp.concatenate(
        [h1[ij * blk:(ij + 1) * blk, :] for ij in range(n_off2)], axis=1)
    h2 = jnp.dot(col2.astype(bf16), w2_ref[...], preferred_element_type=f32)
    h2 = jnp.maximum(h2 + b2_ref[...], 0.0)               # (blk, 64); row = t*n + b

    # conv3 (1x1 output): gather the 9 conv2 positions along lanes, 1 matmul.
    col3 = jnp.concatenate(
        [h2[t * n:(t + 1) * n, :] for t in range(n_off3)], axis=1)
    h3 = jnp.dot(col3.astype(bf16), w3_ref[...], preferred_element_type=f32)
    h3 = jnp.maximum(h3 + b3_ref[...], 0.0)               # (n, 64)

    # fc1 (one matmul; channel-major flatten == identity for 1x1 conv3 out).
    h4 = jnp.dot(h3.astype(bf16), wf1_ref[...], preferred_element_type=f32)
    h4 = jnp.maximum(h4 + bf1_ref[...], 0.0)              # (n, 512)

    # fc2 (no ReLU), lane-padded to 128 for a dense store.
    out_ref[...] = (jnp.dot(h4.astype(bf16), wf2_ref[...],
                            preferred_element_type=f32) + bf2_ref[...])


# --------------------------------------------------------------------------
# Wrapper-side glue (input only): build conv1 patch rows, replicated per
# conv2 kernel offset so the kernel needs only aligned slices + 2 concats.
# --------------------------------------------------------------------------
def _conv1_patch_rows(x_nhwc, oh1, ow1, oh2, ow2, blk):
    """Returns (16*blk, 8*8*C):  row (i*4+j)*blk + (p*ow2+q)*n + b holds the
    raw conv1 input patch (flattened (di, dj, c)) of batch b at conv1 output
    position (2p+i, 2q+j).  Rows 9n..blk-1 of each block are zero padding."""
    n, _, _, c = x_nhwc.shape
    # standard conv1 im2col: (n, oh1, ow1, 8*8*C), columns in (di, dj, c) order
    cols = []
    for di in range(8):
        for dj in range(8):
            cols.append(x_nhwc[:, di:di + (oh1 - 1) * 4 + 1:4,
                               dj:dj + (ow1 - 1) * 4 + 1:4, :])
    patches = jnp.stack(cols, axis=3).reshape(n, oh1, ow1, 8 * 8 * c)
    # replicate per conv2 offset: position (2p+i, 2q+j)
    ii, jj, pp, qq = np.meshgrid(np.arange(4), np.arange(4),
                                 np.arange(oh2), np.arange(ow2), indexing="ij")
    y1 = 2 * pp + ii                                   # (4, 4, oh2, ow2)
    x1 = 2 * qq + jj
    g = patches[:, y1, x1, :]                          # (n, 4,4,oh2,ow2, 256)
    g = jnp.transpose(g, (1, 2, 3, 4, 0, 5))           # (4,4,oh2,ow2,n, 256)
    g = g.reshape(16, oh2 * ow2 * n, 8 * 8 * c)
    g = jnp.pad(g, ((0, 0), (0, blk - oh2 * ow2 * n), (0, 0)))
    return g.reshape(16 * blk, 8 * 8 * c)


@functools.partial(jax.jit, static_argnames=("act_size",))
def a3c_forward(x_nchw, pk, *, act_size):
    n, cin, hh, ww = x_nchw.shape
    x = jnp.transpose(x_nchw.astype(jnp.float32), (0, 2, 3, 1))     # NHWC
    oh1, ow1 = (hh - 8) // 4 + 1, (ww - 8) // 4 + 1
    oh2, ow2 = (oh1 - 4) // 2 + 1, (ow1 - 4) // 2 + 1
    oh3, ow3 = oh2 - 2, ow2 - 2
    # This fused path is specialized to configs where the conv3 output is
    # 1x1 (e.g. 36x36 inputs).
    # TODO(synk): generalize conv3/fc1 stages (im2col per conv3 position,
    # (nsp*64,512)-packed fc1 weight) for larger spatial inputs like 84x84.
    assert oh3 == 1 and ow3 == 1 and oh2 == 3 and ow2 == 3

    blk = ((oh2 * ow2 * n + 7) // 8) * 8                # 8-aligned block rows
    patches = _conv1_patch_rows(x, oh1, ow1, oh2, ow2, blk).astype(jnp.bfloat16)

    n_pad = pk["wf2"].shape[1]                          # 128 (lane-dense)
    kernel = functools.partial(_a3c_fused_kernel, n=n, blk=blk,
                               n_off2=16, n_off3=oh2 * ow2)
    out = pl.pallas_call(
        kernel,
        out_shape=jax.ShapeDtypeStruct((n, n_pad), jnp.float32),
    )(patches, pk["w1"], pk["b1"], pk["w2"], pk["b2"], pk["w3"], pk["b3"],
      pk["wf1"], pk["bf1"], pk["wf2"], pk["bf2"])
    return out[:, :act_size]


# --------------------------------------------------------------------------
# Parameters: PyTorch-style init (HWIO convs, (in,out) fcs), then one-time
# packing into MXU-friendly (K, N) bf16 matrices.
# --------------------------------------------------------------------------
def init_params(key, input_shape, act_size):
    cin, h, w = input_shape

    def uinit(k, shape, fan_in):
        bound = 1.0 / math.sqrt(fan_in)
        return jax.random.uniform(k, shape, jnp.float32, -bound, bound)

    ks = jax.random.split(key, 10)
    p = {}
    p["w1"] = uinit(ks[0], (8, 8, cin, 32), cin * 8 * 8)
    p["b1"] = uinit(ks[1], (32,), cin * 8 * 8)
    p["w2"] = uinit(ks[2], (4, 4, 32, 64), 32 * 4 * 4)
    p["b2"] = uinit(ks[3], (64,), 32 * 4 * 4)
    p["w3"] = uinit(ks[4], (3, 3, 64, 64), 64 * 3 * 3)
    p["b3"] = uinit(ks[5], (64,), 64 * 3 * 3)

    o1 = (h - 8) // 4 + 1
    o2 = (o1 - 4) // 2 + 1
    o3 = (o2 - 3) // 1 + 1
    conv_out = 64 * o3 * o3

    p["wf1"] = uinit(ks[6], (conv_out, 512), conv_out)
    p["bf1"] = uinit(ks[7], (512,), conv_out)
    p["wf2"] = uinit(ks[8], (512, act_size), 512)
    p["bf2"] = uinit(ks[9], (act_size,), 512)
    return p


def pack_params(p, input_shape, n_pad=128):
    """One-time repack into the fused kernel's layouts (bf16 weights)."""
    cin, _, _ = input_shape
    act_size = p["wf2"].shape[1]
    pk = {}
    # conv1 as (K=8*8*cin, 32); 1/256 input scale folded in.
    pk["w1"] = (p["w1"].reshape(8 * 8 * cin, 32) / 256.0).astype(jnp.bfloat16)
    pk["b1"] = p["b1"].reshape(1, 32).astype(jnp.float32)
    # conv2 / conv3 as packed im2col weights (offset-major rows).
    pk["w2"] = p["w2"].reshape(4 * 4 * 32, 64).astype(jnp.bfloat16)
    pk["b2"] = p["b2"].reshape(1, 64).astype(jnp.float32)
    pk["w3"] = p["w3"].reshape(3 * 3 * 64, 64).astype(jnp.bfloat16)
    pk["b3"] = p["b3"].reshape(1, 64).astype(jnp.float32)
    # fc1: conv3 output is 1x1 so PyTorch's channel-major flatten is identity.
    pk["wf1"] = p["wf1"].astype(jnp.bfloat16)
    pk["bf1"] = p["bf1"].reshape(1, 512).astype(jnp.float32)
    # fc2 padded to 128 output lanes for a lane-dense store.
    wf2 = jnp.zeros((512, n_pad), jnp.float32).at[:, :act_size].set(p["wf2"])
    bf2 = jnp.zeros((1, n_pad), jnp.float32).at[0, :act_size].set(p["bf2"])
    pk["wf2"] = wf2.astype(jnp.bfloat16)
    pk["bf2"] = bf2
    return pk


# --------------------------------------------------------------------------
# Pure-JAX f32 reference (mirrors the PyTorch module) for correctness.
# --------------------------------------------------------------------------
def a3c_reference(x_nchw, params):
    x = jnp.transpose(x_nchw.astype(jnp.float32), (0, 2, 3, 1)) / 256.0
    dn = ("NHWC", "HWIO", "NHWC")

    def conv(x, w, b, s):
        y = jax.lax.conv_general_dilated(x, w, (s, s), "VALID",
                                         dimension_numbers=dn)
        return jax.nn.relu(y + b.reshape(1, 1, 1, -1))

    h = conv(x, params["w1"], params["b1"], 4)
    h = conv(h, params["w2"], params["b2"], 2)
    h = conv(h, params["w3"], params["b3"], 1)
    n = h.shape[0]
    h = jnp.transpose(h, (0, 3, 1, 2)).reshape(n, -1)   # PyTorch flatten order
    h = jax.nn.relu(h @ params["wf1"] + params["bf1"])
    return h @ params["wf2"] + params["bf2"]


if __name__ == "__main__":
    batch = 2
    input_shape = (4, 36, 36)   # (C, H, W) -- minimal spatial for this stack
    act_size = 6

    key = jax.random.PRNGKey(0)
    k_x, k_p = jax.random.split(key)
    x = jax.random.uniform(k_x, (batch,) + input_shape, jnp.float32, 0.0, 255.0)
    params = init_params(k_p, input_shape, act_size)
    packed = pack_params(params, input_shape)

    out = jax.block_until_ready(a3c_forward(x, packed, act_size=act_size))
    assert out.shape == (batch, act_size), out.shape
    assert out.dtype == jnp.float32, out.dtype

    ref = jax.block_until_ready(a3c_reference(x, params))
    # bf16 weights/activations on the MXU => relaxed tolerance vs f32 reference.
    assert jnp.allclose(out, ref, rtol=3e-2, atol=3e-2), (
        float(jnp.max(jnp.abs(out - ref))))

    print("KERNEL_OK")
</pallas_src>

<mosaic_0001>
module attributes {stable_mosaic.version = 11 : i64} {
  func.func @_a3c_fused_kernel(%arg0: memref<384x256xbf16, #tpu.memory_space<vmem>>, %arg1: memref<256x32xbf16, #tpu.memory_space<vmem>>, %arg2: memref<1x32xf32, #tpu.memory_space<vmem>>, %arg3: memref<512x64xbf16, #tpu.memory_space<vmem>>, %arg4: memref<1x64xf32, #tpu.memory_space<vmem>>, %arg5: memref<576x64xbf16, #tpu.memory_space<vmem>>, %arg6: memref<1x64xf32, #tpu.memory_space<vmem>>, %arg7: memref<64x512xbf16, #tpu.memory_space<vmem>>, %arg8: memref<1x512xf32, #tpu.memory_space<vmem>>, %arg9: memref<512x128xbf16, #tpu.memory_space<vmem>>, %arg10: memref<1x128xf32, #tpu.memory_space<vmem>>, %arg11: memref<2x128xf32, #tpu.memory_space<vmem>>) attributes {dimension_semantics = [], scalar_prefetch = 0 : i64, scratch_operands = 0 : i64, tpu.core_type = #tpu.core_type<tc>} {
    %c0 = arith.constant 0 : index
    %c0_0 = arith.constant 0 : index
    %0 = vector.load %arg0[%c0, %c0_0] : memref<384x256xbf16, #tpu.memory_space<vmem>>, vector<384x256xbf16>
    %c0_1 = arith.constant 0 : index
    %c0_2 = arith.constant 0 : index
    %1 = vector.load %arg1[%c0_1, %c0_2] : memref<256x32xbf16, #tpu.memory_space<vmem>>, vector<256x32xbf16>
    %cst = arith.constant dense<0.000000e+00> : vector<384x32xf32>
    %2 = tpu.matmul %0, %1, %cst {dimension_numbers = #tpu.dot_dimension_numbers<[1], [0], [0], [1], [0, 0, 1, 1], [], []>} : vector<384x256xbf16>, vector<256x32xbf16>, vector<384x32xf32> -> vector<384x32xf32>
    %c0_3 = arith.constant 0 : index
    %c0_4 = arith.constant 0 : index
    %3 = vector.load %arg2[%c0_3, %c0_4] : memref<1x32xf32, #tpu.memory_space<vmem>>, vector<1x32xf32>
    %4 = vector.broadcast %3 : vector<1x32xf32> to vector<384x32xf32>
    %5 = arith.addf %2, %4 : vector<384x32xf32>
    %cst_5 = arith.constant 0.000000e+00 : f32
    %6 = vector.broadcast %cst_5 : f32 to vector<384x32xf32>
    %7 = arith.maximumf %5, %6 : vector<384x32xf32>
    %8 = vector.extract_strided_slice %7 {offsets = [0, 0], sizes = [24, 32], strides = [1, 1]} : vector<384x32xf32> to vector<24x32xf32>
    %9 = vector.extract_strided_slice %7 {offsets = [24, 0], sizes = [24, 32], strides = [1, 1]} : vector<384x32xf32> to vector<24x32xf32>
    %10 = vector.extract_strided_slice %7 {offsets = [48, 0], sizes = [24, 32], strides = [1, 1]} : vector<384x32xf32> to vector<24x32xf32>
    %11 = vector.extract_strided_slice %7 {offsets = [72, 0], sizes = [24, 32], strides = [1, 1]} : vector<384x32xf32> to vector<24x32xf32>
    %12 = vector.extract_strided_slice %7 {offsets = [96, 0], sizes = [24, 32], strides = [1, 1]} : vector<384x32xf32> to vector<24x32xf32>
    %13 = vector.extract_strided_slice %7 {offsets = [120, 0], sizes = [24, 32], strides = [1, 1]} : vector<384x32xf32> to vector<24x32xf32>
    %14 = vector.extract_strided_slice %7 {offsets = [144, 0], sizes = [24, 32], strides = [1, 1]} : vector<384x32xf32> to vector<24x32xf32>
    %15 = vector.extract_strided_slice %7 {offsets = [168, 0], sizes = [24, 32], strides = [1, 1]} : vector<384x32xf32> to vector<24x32xf32>
    %16 = vector.extract_strided_slice %7 {offsets = [192, 0], sizes = [24, 32], strides = [1, 1]} : vector<384x32xf32> to vector<24x32xf32>
    %17 = vector.extract_strided_slice %7 {offsets = [216, 0], sizes = [24, 32], strides = [1, 1]} : vector<384x32xf32> to vector<24x32xf32>
    %18 = vector.extract_strided_slice %7 {offsets = [240, 0], sizes = [24, 32], strides = [1, 1]} : vector<384x32xf32> to vector<24x32xf32>
    %19 = vector.extract_strided_slice %7 {offsets = [264, 0], sizes = [24, 32], strides = [1, 1]} : vector<384x32xf32> to vector<24x32xf32>
    %20 = vector.extract_strided_slice %7 {offsets = [288, 0], sizes = [24, 32], strides = [1, 1]} : vector<384x32xf32> to vector<24x32xf32>
    %21 = vector.extract_strided_slice %7 {offsets = [312, 0], sizes = [24, 32], strides = [1, 1]} : vector<384x32xf32> to vector<24x32xf32>
    %22 = vector.extract_strided_slice %7 {offsets = [336, 0], sizes = [24, 32], strides = [1, 1]} : vector<384x32xf32> to vector<24x32xf32>
    %23 = vector.extract_strided_slice %7 {offsets = [360, 0], sizes = [24, 32], strides = [1, 1]} : vector<384x32xf32> to vector<24x32xf32>
    %24 = tpu.concatenate %8, %9, %10, %11, %12, %13, %14, %15, %16, %17, %18, %19, %20, %21, %22, %23 in 1 : vector<24x32xf32>, vector<24x32xf32>, vector<24x32xf32>, vector<24x32xf32>, vector<24x32xf32>, vector<24x32xf32>, vector<24x32xf32>, vector<24x32xf32>, vector<24x32xf32>, vector<24x32xf32>, vector<24x32xf32>, vector<24x32xf32>, vector<24x32xf32>, vector<24x32xf32>, vector<24x32xf32>, vector<24x32xf32> -> vector<24x512xf32>
    %25 = arith.truncf %24 : vector<24x512xf32> to vector<24x512xbf16>
    %c0_6 = arith.constant 0 : index
    %c0_7 = arith.constant 0 : index
    %26 = vector.load %arg3[%c0_6, %c0_7] : memref<512x64xbf16, #tpu.memory_space<vmem>>, vector<512x64xbf16>
    %cst_8 = arith.constant dense<0.000000e+00> : vector<24x64xf32>
    %27 = tpu.matmul %25, %26, %cst_8 {dimension_numbers = #tpu.dot_dimension_numbers<[1], [0], [0], [1], [0, 0, 1, 1], [], []>} : vector<24x512xbf16>, vector<512x64xbf16>, vector<24x64xf32> -> vector<24x64xf32>
    %c0_9 = arith.constant 0 : index
    %c0_10 = arith.constant 0 : index
    %28 = vector.load %arg4[%c0_9, %c0_10] : memref<1x64xf32, #tpu.memory_space<vmem>>, vector<1x64xf32>
    %29 = vector.broadcast %28 : vector<1x64xf32> to vector<24x64xf32>
    %30 = arith.addf %27, %29 : vector<24x64xf32>
    %cst_11 = arith.constant 0.000000e+00 : f32
    %31 = vector.broadcast %cst_11 : f32 to vector<24x64xf32>
    %32 = arith.maximumf %30, %31 : vector<24x64xf32>
    %33 = vector.extract_strided_slice %32 {offsets = [0, 0], sizes = [2, 64], strides = [1, 1]} : vector<24x64xf32> to vector<2x64xf32>
    %34 = vector.extract_strided_slice %32 {offsets = [2, 0], sizes = [2, 64], strides = [1, 1]} : vector<24x64xf32> to vector<2x64xf32>
    %35 = vector.extract_strided_slice %32 {offsets = [4, 0], sizes = [2, 64], strides = [1, 1]} : vector<24x64xf32> to vector<2x64xf32>
    %36 = vector.extract_strided_slice %32 {offsets = [6, 0], sizes = [2, 64], strides = [1, 1]} : vector<24x64xf32> to vector<2x64xf32>
    %37 = vector.extract_strided_slice %32 {offsets = [8, 0], sizes = [2, 64], strides = [1, 1]} : vector<24x64xf32> to vector<2x64xf32>
    %38 = vector.extract_strided_slice %32 {offsets = [10, 0], sizes = [2, 64], strides = [1, 1]} : vector<24x64xf32> to vector<2x64xf32>
    %39 = vector.extract_strided_slice %32 {offsets = [12, 0], sizes = [2, 64], strides = [1, 1]} : vector<24x64xf32> to vector<2x64xf32>
    %40 = vector.extract_strided_slice %32 {offsets = [14, 0], sizes = [2, 64], strides = [1, 1]} : vector<24x64xf32> to vector<2x64xf32>
    %41 = vector.extract_strided_slice %32 {offsets = [16, 0], sizes = [2, 64], strides = [1, 1]} : vector<24x64xf32> to vector<2x64xf32>
    %42 = tpu.concatenate %33, %34, %35, %36, %37, %38, %39, %40, %41 in 1 : vector<2x64xf32>, vector<2x64xf32>, vector<2x64xf32>, vector<2x64xf32>, vector<2x64xf32>, vector<2x64xf32>, vector<2x64xf32>, vector<2x64xf32>, vector<2x64xf32> -> vector<2x576xf32>
    %43 = arith.truncf %42 : vector<2x576xf32> to vector<2x576xbf16>
    %c0_12 = arith.constant 0 : index
    %c0_13 = arith.constant 0 : index
    %44 = vector.load %arg5[%c0_12, %c0_13] : memref<576x64xbf16, #tpu.memory_space<vmem>>, vector<576x64xbf16>
    %cst_14 = arith.constant dense<0.000000e+00> : vector<2x64xf32>
    %45 = tpu.matmul %43, %44, %cst_14 {dimension_numbers = #tpu.dot_dimension_numbers<[1], [0], [0], [1], [0, 0, 1, 1], [], []>} : vector<2x576xbf16>, vector<576x64xbf16>, vector<2x64xf32> -> vector<2x64xf32>
    %c0_15 = arith.constant 0 : index
    %c0_16 = arith.constant 0 : index
    %46 = vector.load %arg6[%c0_15, %c0_16] : memref<1x64xf32, #tpu.memory_space<vmem>>, vector<1x64xf32>
    %47 = vector.broadcast %46 : vector<1x64xf32> to vector<2x64xf32>
    %48 = arith.addf %45, %47 : vector<2x64xf32>
    %cst_17 = arith.constant 0.000000e+00 : f32
    %49 = vector.broadcast %cst_17 : f32 to vector<2x64xf32>
    %50 = arith.maximumf %48, %49 : vector<2x64xf32>
    %51 = arith.truncf %50 : vector<2x64xf32> to vector<2x64xbf16>
    %c0_18 = arith.constant 0 : index
    %c0_19 = arith.constant 0 : index
    %52 = vector.load %arg7[%c0_18, %c0_19] : memref<64x512xbf16, #tpu.memory_space<vmem>>, vector<64x512xbf16>
    %cst_20 = arith.constant dense<0.000000e+00> : vector<2x512xf32>
    %53 = tpu.matmul %51, %52, %cst_20 {dimension_numbers = #tpu.dot_dimension_numbers<[1], [0], [0], [1], [0, 0, 1, 1], [], []>} : vector<2x64xbf16>, vector<64x512xbf16>, vector<2x512xf32> -> vector<2x512xf32>
    %c0_21 = arith.constant 0 : index
    %c0_22 = arith.constant 0 : index
    %54 = vector.load %arg8[%c0_21, %c0_22] : memref<1x512xf32, #tpu.memory_space<vmem>>, vector<1x512xf32>
    %55 = vector.broadcast %54 : vector<1x512xf32> to vector<2x512xf32>
    %56 = arith.addf %53, %55 : vector<2x512xf32>
    %cst_23 = arith.constant 0.000000e+00 : f32
    %57 = vector.broadcast %cst_23 : f32 to vector<2x512xf32>
    %58 = arith.maximumf %56, %57 : vector<2x512xf32>
    %59 = arith.truncf %58 : vector<2x512xf32> to vector<2x512xbf16>
    %c0_24 = arith.constant 0 : index
    %c0_25 = arith.constant 0 : index
    %60 = vector.load %arg9[%c0_24, %c0_25] : memref<512x128xbf16, #tpu.memory_space<vmem>>, vector<512x128xbf16>
    %cst_26 = arith.constant dense<0.000000e+00> : vector<2x128xf32>
    %61 = tpu.matmul %59, %60, %cst_26 {dimension_numbers = #tpu.dot_dimension_numbers<[1], [0], [0], [1], [0, 0, 1, 1], [], []>} : vector<2x512xbf16>, vector<512x128xbf16>, vector<2x128xf32> -> vector<2x128xf32>
    %c0_27 = arith.constant 0 : index
    %c0_28 = arith.constant 0 : index
    %62 = vector.load %arg10[%c0_27, %c0_28] : memref<1x128xf32, #tpu.memory_space<vmem>>, vector<1x128xf32>
    %63 = vector.broadcast %62 : vector<1x128xf32> to vector<2x128xf32>
    %64 = arith.addf %61, %63 : vector<2x128xf32>
    %c0_29 = arith.constant 0 : index
    %c0_30 = arith.constant 0 : index
    %65 = vector.load %arg11[%c0_29, %c0_30] : memref<2x128xf32, #tpu.memory_space<vmem>>, vector<2x128xf32>
    tpu.vector_store %arg11[%c0_29, %c0_30], %64 {strides = array<i32>} : memref<2x128xf32, #tpu.memory_space<vmem>>, vector<2x128xf32>,
    return
  }
}

</mosaic_0001>

<llo_original>
// kernel: a3c_forward.1
$region0: #{a3c_forward.1}
  #allocation0 [shape = 'u32[]', space=smem, size = 0x4, offset = 0x4, fixed_abs, tag = 'smem constant byte address 0x4 - core index']
  #allocation1 [shape = 'u32[72,128]{1,0:T(1,128)}', space=vmem, size = 0x9000, scoped, tag = 'internal scratch']
  %s0 = inlined_call_operand.vmem [shape: bf16[384,256], index: 0, kind: input, shape index: {}]
  %s1 = inlined_call_operand.vmem [shape: bf16[256,32], index: 1, kind: input, shape index: {}]
  %s2 = inlined_call_operand.vmem [shape: f32[1,32], index: 2, kind: input, shape index: {}]
  %s3 = inlined_call_operand.vmem [shape: bf16[512,64], index: 3, kind: input, shape index: {}]
  %s4 = inlined_call_operand.vmem [shape: f32[1,64], index: 4, kind: input, shape index: {}]
  %s5 = inlined_call_operand.vmem [shape: bf16[576,64], index: 5, kind: input, shape index: {}]
  %s6 = inlined_call_operand.vmem [shape: f32[1,64], index: 6, kind: input, shape index: {}]
  %s7 = inlined_call_operand.vmem [shape: bf16[64,512], index: 7, kind: input, shape index: {}]
  %s8 = inlined_call_operand.vmem [shape: f32[1,512], index: 8, kind: input, shape index: {}]
  %s9 = inlined_call_operand.vmem [shape: bf16[512,128], index: 9, kind: input, shape index: {}]
  %s10 = inlined_call_operand.vmem [shape: f32[1,128], index: 10, kind: input, shape index: {}]
  %s11 = inlined_call_operand.hbm [shape: f32[2,128], index: 11, kind: output, shape index: {}]
  %s12 = sld [smem:[#allocation0]]
  $region54: #{a3c_forward.1} parent=0
    _
  %s14 = ssub.s32 1, %s12
  %s15 = scalar_select 0, %s14, %s12
  $region1: #{a3c_forward.1} parent=0
    #allocation2 [shape = 'u8[1024]{0}', space=vmem, size = 0x400, scoped, tag = 'output window, operand 0, single buffered']
    #allocation3 [shape = 's32[1]{0}', space=sflag, size = 0x4, scoped, tag = 'scoped memory for a3c_forward.1']
    %16 = vsyncpa [#allocation3], 0
    // Predicated region
    $region2: #{a3c_forward.1} parent=1 // pred_check
      _
    $region3: #{a3c_forward.1} parent=1 // pred_check_branch
      %18 = sbr.rel (0) target = $region5
    $region4: #{a3c_forward.1} parent=1 // pred_region
      _
    $region5: #{a3c_forward.1} parent=1 // pred_fallthru
      _
    // Predicated region
    $region6: #{a3c_forward.1} parent=1 // pred_check
      _
    $region7: #{a3c_forward.1} parent=1 // pred_check_branch
      %20 = sbr.rel (0) target = $region9
    $region8: #{a3c_forward.1} parent=1 // pred_region
      _
    $region9: #{a3c_forward.1} parent=1 // pred_fallthru
      _
    // Predicated region
    $region10: #{a3c_forward.1} parent=1 // pred_check
      _
    $region11: #{a3c_forward.1} parent=1 // pred_check_branch
      %22 = sbr.rel (0) target = $region13
    $region12: #{a3c_forward.1} parent=1 // pred_region
      _
    $region13: #{a3c_forward.1} parent=1 // pred_fallthru
      _
    // Predicated region
    $region14: #{a3c_forward.1} parent=1 // pred_check
      _
    $region15: #{a3c_forward.1} parent=1 // pred_check_branch
      %24 = sbr.rel (0) target = $region17
    $region16: #{a3c_forward.1} parent=1 // pred_region
      _
    $region17: #{a3c_forward.1} parent=1 // pred_fallthru
      _
    // Predicated region
    $region18: #{a3c_forward.1} parent=1 // pred_check
      _
    $region19: #{a3c_forward.1} parent=1 // pred_check_branch
      %26 = sbr.rel (0) target = $region21
    $region20: #{a3c_forward.1} parent=1 // pred_region
      _
    $region21: #{a3c_forward.1} parent=1 // pred_fallthru
      _
    // Predicated region
    $region22: #{a3c_forward.1} parent=1 // pred_check
      _
    $region23: #{a3c_forward.1} parent=1 // pred_check_branch
      %28 = sbr.rel (0) target = $region25
    $region24: #{a3c_forward.1} parent=1 // pred_region
      _
    $region25: #{a3c_forward.1} parent=1 // pred_fallthru
      _
    // Predicated region
    $region26: #{a3c_forward.1} parent=1 // pred_check
      _
    $region27: #{a3c_forward.1} parent=1 // pred_check_branch
      %30 = sbr.rel (0) target = $region29
    $region28: #{a3c_forward.1} parent=1 // pred_region
      _
    $region29: #{a3c_forward.1} parent=1 // pred_fallthru
      _
    // Predicated region
    $region30: #{a3c_forward.1} parent=1 // pred_check
      _
    $region31: #{a3c_forward.1} parent=1 // pred_check_branch
      %32 = sbr.rel (0) target = $region33
    $region32: #{a3c_forward.1} parent=1 // pred_region
      _
    $region33: #{a3c_forward.1} parent=1 // pred_fallthru
      _
    // Predicated region
    $region34: #{a3c_forward.1} parent=1 // pred_check
      _
    $region35: #{a3c_forward.1} parent=1 // pred_check_branch
      %34 = sbr.rel (0) target = $region37
    $region36: #{a3c_forward.1} parent=1 // pred_region
      _
    $region37: #{a3c_forward.1} parent=1 // pred_fallthru
      _
    // Predicated region
    $region38: #{a3c_forward.1} parent=1 // pred_check
      _
    $region39: #{a3c_forward.1} parent=1 // pred_check_branch
      %36 = sbr.rel (0) target = $region41
    $region40: #{a3c_forward.1} parent=1 // pred_region
      _
    $region41: #{a3c_forward.1} parent=1 // pred_fallthru
      _
    // Predicated region
    $region42: #{a3c_forward.1} parent=1 // pred_check
      _
    $region43: #{a3c_forward.1} parent=1 // pred_check_branch
      %38 = sbr.rel (0) target = $region45
    $region44: #{a3c_forward.1} parent=1 // pred_region
      _
    $region45: #{a3c_forward.1} parent=1 // pred_fallthru
      _
    %v40 = vld [vmem:[%s0] sm:$0xff]
    %v41 = vld [vmem:[%s0 + $0x8] sm:$0xff]
    %v42 = vld [vmem:[%s0 + $0x10] sm:$0xff]
    %v43 = vld [vmem:[%s0 + $0x18] sm:$0xff]
    %v44 = vld [vmem:[%s0 + $0x20] sm:$0xff]
    %v45 = vld [vmem:[%s0 + $0x28] sm:$0xff]
    %v46 = vld [vmem:[%s0 + $0x30] sm:$0xff]
    %v47 = vld [vmem:[%s0 + $0x38] sm:$0xff]
    %v48 = vld [vmem:[%s0 + $0x40] sm:$0xff]
    %v49 = vld [vmem:[%s0 + $0x48] sm:$0xff]
    %v50 = vld [vmem:[%s0 + $0x50] sm:$0xff]
    %v51 = vld [vmem:[%s0 + $0x58] sm:$0xff]
    %v52 = vld [vmem:[%s0 + $0x60] sm:$0xff]
    %v53 = vld [vmem:[%s0 + $0x68] sm:$0xff]
    %v54 = vld [vmem:[%s0 + $0x70] sm:$0xff]
    %v55 = vld [vmem:[%s0 + $0x78] sm:$0xff]
    %v56 = vld [vmem:[%s0 + $0x80] sm:$0xff]
    %v57 = vld [vmem:[%s0 + $0x88] sm:$0xff]
    %v58 = vld [vmem:[%s0 + $0x90] sm:$0xff]
    %v59 = vld [vmem:[%s0 + $0x98] sm:$0xff]
    %v60 = vld [vmem:[%s0 + $0xa0] sm:$0xff]
    %v61 = vld [vmem:[%s0 + $0xa8] sm:$0xff]
    %v62 = vld [vmem:[%s0 + $0xb0] sm:$0xff]
    %v63 = vld [vmem:[%s0 + $0xb8] sm:$0xff]
    %v64 = vld [vmem:[%s0 + $0xc0] sm:$0xff]
    %v65 = vld [vmem:[%s0 + $0xc8] sm:$0xff]
    %v66 = vld [vmem:[%s0 + $0xd0] sm:$0xff]
    %v67 = vld [vmem:[%s0 + $0xd8] sm:$0xff]
    %v68 = vld [vmem:[%s0 + $0xe0] sm:$0xff]
    %v69 = vld [vmem:[%s0 + $0xe8] sm:$0xff]
    %v70 = vld [vmem:[%s0 + $0xf0] sm:$0xff]
    %v71 = vld [vmem:[%s0 + $0xf8] sm:$0xff]
    %v72 = vld [vmem:[%s0 + $0x100] sm:$0xff]
    %v73 = vld [vmem:[%s0 + $0x108] sm:$0xff]
    %v74 = vld [vmem:[%s0 + $0x110] sm:$0xff]
    %v75 = vld [vmem:[%s0 + $0x118] sm:$0xff]
    %v76 = vld [vmem:[%s0 + $0x120] sm:$0xff]
    %v77 = vld [vmem:[%s0 + $0x128] sm:$0xff]
    %v78 = vld [vmem:[%s0 + $0x130] sm:$0xff]
    %v79 = vld [vmem:[%s0 + $0x138] sm:$0xff]
    %v80 = vld [vmem:[%s0 + $0x140] sm:$0xff]
    %v81 = vld [vmem:[%s0 + $0x148] sm:$0xff]
    %v82 = vld [vmem:[%s0 + $0x150] sm:$0xff]
    %v83 = vld [vmem:[%s0 + $0x158] sm:$0xff]
    %v84 = vld [vmem:[%s0 + $0x160] sm:$0xff]
    %v85 = vld [vmem:[%s0 + $0x168] sm:$0xff]
    %v86 = vld [vmem:[%s0 + $0x170] sm:$0xff]
    %v87 = vld [vmem:[%s0 + $0x178] sm:$0xff]
    %v88 = vld [vmem:[%s1] sm:$0xf]
    %v89 = vld [vmem:[%s1 + $0x4] sm:$0xf]
    %v90 = vld [vmem:[%s1 + $0x8] sm:$0xf]
    %v91 = vld [vmem:[%s1 + $0xc] sm:$0xf]
    %v92 = vld [vmem:[%s1 + $0x10] sm:$0xf]
    %v93 = vld [vmem:[%s1 + $0x14] sm:$0xf]
    %v94 = vld [vmem:[%s1 + $0x18] sm:$0xf]
    %v95 = vld [vmem:[%s1 + $0x1c] sm:$0xf]
    %v96 = vld [vmem:[%s1 + $0x20] sm:$0xf]
    %v97 = vld [vmem:[%s1 + $0x24] sm:$0xf]
    %v98 = vld [vmem:[%s1 + $0x28] sm:$0xf]
    %v99 = vld [vmem:[%s1 + $0x2c] sm:$0xf]
    %v100 = vld [vmem:[%s1 + $0x30] sm:$0xf]
    %v101 = vld [vmem:[%s1 + $0x34] sm:$0xf]
    %v102 = vld [vmem:[%s1 + $0x38] sm:$0xf]
    %v103 = vld [vmem:[%s1 + $0x3c] sm:$0xf]
    %v104 = vld [vmem:[%s1 + $0x40] sm:$0xf]
    %v105 = vld [vmem:[%s1 + $0x44] sm:$0xf]
    %v106 = vld [vmem:[%s1 + $0x48] sm:$0xf]
    %v107 = vld [vmem:[%s1 + $0x4c] sm:$0xf]
    %v108 = vld [vmem:[%s1 + $0x50] sm:$0xf]
    %v109 = vld [vmem:[%s1 + $0x54] sm:$0xf]
    %v110 = vld [vmem:[%s1 + $0x58] sm:$0xf]
    %v111 = vld [vmem:[%s1 + $0x5c] sm:$0xf]
    %v112 = vld [vmem:[%s1 + $0x60] sm:$0xf]
    %v113 = vld [vmem:[%s1 + $0x64] sm:$0xf]
    %v114 = vld [vmem:[%s1 + $0x68] sm:$0xf]
    %v115 = vld [vmem:[%s1 + $0x6c] sm:$0xf]
    %v116 = vld [vmem:[%s1 + $0x70] sm:$0xf]
    %v117 = vld [vmem:[%s1 + $0x74] sm:$0xf]
    %v118 = vld [vmem:[%s1 + $0x78] sm:$0xf]
    %v119 = vld [vmem:[%s1 + $0x7c] sm:$0xf]
    %v120 = vld [vmem:[%s2] sm:$0x1]
    %v122 = vperm.slane %v120, 0
    %v172 = vunpack.c.l.b16 %v40
    %v173 = vunpack.c.h.b16 %v40
    %v174 = vunpack.c.l.b16 %v41
    %v175 = vunpack.c.h.b16 %v41
    %v176 = vunpack.c.l.b16 %v42
    %v177 = vunpack.c.h.b16 %v42
    %v178 = vunpack.c.l.b16 %v43
    %v179 = vunpack.c.h.b16 %v43
    %v180 = vunpack.c.l.b16 %v44
    %v181 = vunpack.c.h.b16 %v44
    %v182 = vunpack.c.l.b16 %v45
    %v183 = vunpack.c.h.b16 %v45
    %v184 = vunpack.c.l.b16 %v46
    %v185 = vunpack.c.h.b16 %v46
    %v186 = vunpack.c.l.b16 %v47
    %v187 = vunpack.c.h.b16 %v47
    %v188 = vunpack.c.l.b16 %v48
    %v189 = vunpack.c.h.b16 %v48
    %v190 = vunpack.c.l.b16 %v49
    %v191 = vunpack.c.h.b16 %v49
    %v192 = vunpack.c.l.b16 %v50
    %v193 = vunpack.c.h.b16 %v50
    %v194 = vunpack.c.l.b16 %v51
    %v195 = vunpack.c.h.b16 %v51
    %v196 = vunpack.c.l.b16 %v52
    %v197 = vunpack.c.h.b16 %v52
    %v198 = vunpack.c.l.b16 %v53
    %v199 = vunpack.c.h.b16 %v53
    %v200 = vunpack.c.l.b16 %v54
    %v201 = vunpack.c.h.b16 %v54
    %v202 = vunpack.c.l.b16 %v55
    %v203 = vunpack.c.h.b16 %v55
    %v204 = vunpack.c.l.b16 %v56
    %v205 = vunpack.c.h.b16 %v56
    %v206 = vunpack.c.l.b16 %v57
    %v207 = vunpack.c.h.b16 %v57
    %v208 = vunpack.c.l.b16 %v58
    %v209 = vunpack.c.h.b16 %v58
    %v210 = vunpack.c.l.b16 %v59
    %v211 = vunpack.c.h.b16 %v59
    %v212 = vunpack.c.l.b16 %v60
    %v213 = vunpack.c.h.b16 %v60
    %v214 = vunpack.c.l.b16 %v61
    %v215 = vunpack.c.h.b16 %v61
    %v216 = vunpack.c.l.b16 %v62
    %v217 = vunpack.c.h.b16 %v62
    %v218 = vunpack.c.l.b16 %v63
    %v219 = vunpack.c.h.b16 %v63
    %v220 = vunpack.c.l.b16 %v64
    %v221 = vunpack.c.h.b16 %v64
    %v222 = vunpack.c.l.b16 %v65
    %v223 = vunpack.c.h.b16 %v65
    %v224 = vunpack.c.l.b16 %v66
    %v225 = vunpack.c.h.b16 %v66
    %v226 = vunpack.c.l.b16 %v67
    %v227 = vunpack.c.h.b16 %v67
    %v228 = vunpack.c.l.b16 %v68
    %v229 = vunpack.c.h.b16 %v68
    %v230 = vunpack.c.l.b16 %v69
    %v231 = vunpack.c.h.b16 %v69
    %v232 = vunpack.c.l.b16 %v70
    %v233 = vunpack.c.h.b16 %v70
    %v234 = vunpack.c.l.b16 %v71
    %v235 = vunpack.c.h.b16 %v71
    %v236 = vunpack.c.l.b16 %v72
    %v237 = vunpack.c.h.b16 %v72
    %v238 = vunpack.c.l.b16 %v73
    %v239 = vunpack.c.h.b16 %v73
    %v240 = vunpack.c.l.b16 %v74
    %v241 = vunpack.c.h.b16 %v74
    %v242 = vunpack.c.l.b16 %v75
    %v243 = vunpack.c.h.b16 %v75
    %v244 = vunpack.c.l.b16 %v76
    %v245 = vunpack.c.h.b16 %v76
    %v246 = vunpack.c.l.b16 %v77
    %v247 = vunpack.c.h.b16 %v77
    %v248 = vunpack.c.l.b16 %v78
    %v249 = vunpack.c.h.b16 %v78
    %v250 = vunpack.c.l.b16 %v79
    %v251 = vunpack.c.h.b16 %v79
    %v252 = vunpack.c.l.b16 %v80
    %v253 = vunpack.c.h.b16 %v80
    %v254 = vunpack.c.l.b16 %v81
    %v255 = vunpack.c.h.b16 %v81
    %v256 = vunpack.c.l.b16 %v82
    %v257 = vunpack.c.h.b16 %v82
    %v258 = vunpack.c.l.b16 %v83
    %v259 = vunpack.c.h.b16 %v83
    %v260 = vunpack.c.l.b16 %v84
    %v261 = vunpack.c.h.b16 %v84
    %v262 = vunpack.c.l.b16 %v85
    %v263 = vunpack.c.h.b16 %v85
    %v264 = vunpack.c.l.b16 %v86
    %v265 = vunpack.c.h.b16 %v86
    %v266 = vunpack.c.l.b16 %v87
    %v267 = vunpack.c.h.b16 %v87
    %v268 = vpack.c.b16 %v174, %v172
    %v269 = vpack.c.b16 %v175, %v173
    %v270 = vpack.c.b16 %v178, %v176
    %v271 = vpack.c.b16 %v179, %v177
    %v272 = vpack.c.b16 %v182, %v180
    %v273 = vpack.c.b16 %v183, %v181
    %v274 = vpack.c.b16 %v186, %v184
    %v275 = vpack.c.b16 %v187, %v185
    %v276 = vpack.c.b16 %v190, %v188
    %v277 = vpack.c.b16 %v191, %v189
    %v278 = vpack.c.b16 %v194, %v192
    %v279 = vpack.c.b16 %v195, %v193
    %v280 = vpack.c.b16 %v198, %v196
    %v281 = vpack.c.b16 %v199, %v197
    %v282 = vpack.c.b16 %v202, %v200
    %v283 = vpack.c.b16 %v203, %v201
    %v284 = vpack.c.b16 %v206, %v204
    %v285 = vpack.c.b16 %v207, %v205
    %v286 = vpack.c.b16 %v210, %v208
    %v287 = vpack.c.b16 %v211, %v209
    %v288 = vpack.c.b16 %v214, %v212
    %v289 = vpack.c.b16 %v215, %v213
    %v290 = vpack.c.b16 %v218, %v216
    %v291 = vpack.c.b16 %v219, %v217
    %v292 = vpack.c.b16 %v222, %v220
    %v293 = vpack.c.b16 %v223, %v221
    %v294 = vpack.c.b16 %v226, %v224
    %v295 = vpack.c.b16 %v227, %v225
    %v296 = vpack.c.b16 %v230, %v228
    %v297 = vpack.c.b16 %v231, %v229
    %v298 = vpack.c.b16 %v234, %v232
    %v299 = vpack.c.b16 %v235, %v233
    %v300 = vpack.c.b16 %v238, %v236
    %v301 = vpack.c.b16 %v239, %v237
    %v302 = vpack.c.b16 %v242, %v240
    %v303 = vpack.c.b16 %v243, %v241
    %v304 = vpack.c.b16 %v246, %v244
    %v305 = vpack.c.b16 %v247, %v245
    %v306 = vpack.c.b16 %v250, %v248
    %v307 = vpack.c.b16 %v251, %v249
    %v308 = vpack.c.b16 %v254, %v252
    %v309 = vpack.c.b16 %v255, %v253
    %v310 = vpack.c.b16 %v258, %v256
    %v311 = vpack.c.b16 %v259, %v257
    %v312 = vpack.c.b16 %v262, %v260
    %v313 = vpack.c.b16 %v263, %v261
    %v314 = vpack.c.b16 %v266, %v264
    %v315 = vpack.c.b16 %v267, %v265
    %v396 = vunpack.c.l.b16 %v88
    %v397 = vunpack.c.l.b16 %v89
    %v398 = vunpack.c.l.b16 %v90
    %v399 = vunpack.c.l.b16 %v91
    %v400 = vunpack.c.l.b16 %v92
    %v401 = vunpack.c.l.b16 %v93
    %v402 = vunpack.c.l.b16 %v94
    %v403 = vunpack.c.l.b16 %v95
    %v404 = vunpack.c.l.b16 %v96
    %v405 = vunpack.c.l.b16 %v97
    %v406 = vunpack.c.l.b16 %v98
    %v407 = vunpack.c.l.b16 %v99
    %v408 = vunpack.c.l.b16 %v100
    %v409 = vunpack.c.l.b16 %v101
    %v410 = vunpack.c.l.b16 %v102
    %v411 = vunpack.c.l.b16 %v103
    %v412 = vunpack.c.l.b16 %v104
    %v413 = vunpack.c.l.b16 %v105
    %v414 = vunpack.c.l.b16 %v106
    %v415 = vunpack.c.l.b16 %v107
    %v416 = vunpack.c.l.b16 %v108
    %v417 = vunpack.c.l.b16 %v109
    %v418 = vunpack.c.l.b16 %v110
    %v419 = vunpack.c.l.b16 %v111
    %v420 = vunpack.c.l.b16 %v112
    %v421 = vunpack.c.l.b16 %v113
    %v422 = vunpack.c.l.b16 %v114
    %v423 = vunpack.c.l.b16 %v115
    %v424 = vunpack.c.l.b16 %v116
    %v425 = vunpack.c.l.b16 %v117
    %v426 = vunpack.c.l.b16 %v118
    %v427 = vunpack.c.l.b16 %v119
    %v428 = vpack.c.b16 %v397, %v396
    %v429 = vpack.c.b16 %v399, %v398
    %v430 = vpack.c.b16 %v401, %v400
    %v431 = vpack.c.b16 %v403, %v402
    %v432 = vpack.c.b16 %v405, %v404
    %v433 = vpack.c.b16 %v407, %v406
    %v434 = vpack.c.b16 %v409, %v408
    %v435 = vpack.c.b16 %v411, %v410
    %v436 = vpack.c.b16 %v413, %v412
    %v437 = vpack.c.b16 %v415, %v414
    %v438 = vpack.c.b16 %v417, %v416
    %v439 = vpack.c.b16 %v419, %v418
    %v440 = vpack.c.b16 %v421, %v420
    %v441 = vpack.c.b16 %v423, %v422
    %v442 = vpack.c.b16 %v425, %v424
    %v443 = vpack.c.b16 %v427, %v426
    %460 = vmatpush.bf16.msra.mxu0 %v435
    %461 = vmatpush.bf16.msra.mxu0 %v434
    %462 = vmatpush.bf16.msra.mxu0 %v433
    %463 = vmatpush.bf16.msra.mxu0 %v432
    %464 = vmatpush.bf16.msra.mxu0 %v431
    %465 = vmatpush.bf16.msra.mxu0 %v430
    %466 = vmatpush.bf16.msra.mxu0 %v429
    %467 = vmatpush.bf16.msra.mxu0 %v428
    %468 = vmatmul.bf16.gmra.mxu0 %v268
    %v469 = vpop.f32.mrf.mxu0
    %v470 = vadd.f32 %v122, %v469
    %v471 = vpop.f32.mrf.mxu0
    %v472 = vadd.f32 %v122, %v471
    %473 = vmatmul.bf16.gmra.mxu0 %v270
    %v474 = vpop.f32.mrf.mxu0
    %v475 = vadd.f32 %v122, %v474
    %v476 = vpop.f32.mrf.mxu0
    %v477 = vadd.f32 %v122, %v476
    %478 = vmatmul.bf16.gmra.mxu0 %v272
    %v479 = vpop.f32.mrf.mxu0
    %v480 = vadd.f32 %v122, %v479
    %v481 = vpop.f32.mrf.mxu0
    %v482 = vadd.f32 %v122, %v481
    %483 = vmatmul.bf16.gmra.mxu0 %v274
    %v484 = vpop.f32.mrf.mxu0
    %v485 = vadd.f32 %v122, %v484
    %v486 = vpop.f32.mrf.mxu0
    %v487 = vadd.f32 %v122, %v486
    %488 = vmatmul.bf16.gmra.mxu0 %v276
    %v489 = vpop.f32.mrf.mxu0
    %v490 = vadd.f32 %v122, %v489
    %v491 = vpop.f32.mrf.mxu0
    %v492 = vadd.f32 %v122, %v491
    %493 = vmatmul.bf16.gmra.mxu0 %v278
    %v494 = vpop.f32.mrf.mxu0
    %v495 = vadd.f32 %v122, %v494
    %v496 = vpop.f32.mrf.mxu0
    %v497 = vadd.f32 %v122, %v496
    %498 = vmatmul.bf16.gmra.mxu0 %v280
    %v499 = vpop.f32.mrf.mxu0
    %v500 = vadd.f32 %v122, %v499
    %v501 = vpop.f32.mrf.mxu0
    %v502 = vadd.f32 %v122, %v501
    %503 = vmatmul.bf16.gmra.mxu0 %v282
    %v504 = vpop.f32.mrf.mxu0
    %v505 = vadd.f32 %v122, %v504
    %v506 = vpop.f32.mrf.mxu0
    %v507 = vadd.f32 %v122, %v506
    %508 = vmatmul.bf16.gmra.mxu0 %v284
    %v509 = vpop.f32.mrf.mxu0
    %v510 = vadd.f32 %v122, %v509
    %v511 = vpop.f32.mrf.mxu0
    %v512 = vadd.f32 %v122, %v511
    %513 = vmatmul.bf16.gmra.mxu0 %v286
    %v514 = vpop.f32.mrf.mxu0
    %v515 = vadd.f32 %v122, %v514
    %v516 = vpop.f32.mrf.mxu0
    %v517 = vadd.f32 %v122, %v516
    %518 = vmatmul.bf16.gmra.mxu0 %v288
    %v519 = vpop.f32.mrf.mxu0
    %v520 = vadd.f32 %v122, %v519
    %v521 = vpop.f32.mrf.mxu0
    %v522 = vadd.f32 %v122, %v521
    %523 = vmatmul.bf16.gmra.mxu0 %v290
    %v524 = vpop.f32.mrf.mxu0
    %v525 = vadd.f32 %v122, %v524
    %v526 = vpop.f32.mrf.mxu0
    %v527 = vadd.f32 %v122, %v526
    %528 = vmatmul.bf16.gmra.mxu0 %v292
    %v529 = vpop.f32.mrf.mxu0
    %v530 = vadd.f32 %v122, %v529
    %v531 = vpop.f32.mrf.mxu0
    %v532 = vadd.f32 %v122, %v531
    %533 = vmatmul.bf16.gmra.mxu0 %v294
    %v534 = vpop.f32.mrf.mxu0
    %v535 = vadd.f32 %v122, %v534
    %v536 = vpop.f32.mrf.mxu0
    %v537 = vadd.f32 %v122, %v536
    %538 = vmatmul.bf16.gmra.mxu0 %v296
    %v539 = vpop.f32.mrf.mxu0
    %v540 = vadd.f32 %v122, %v539
    %v541 = vpop.f32.mrf.mxu0
    %v542 = vadd.f32 %v122, %v541
    %543 = vmatmul.bf16.gmra.mxu0 %v298
    %v544 = vpop.f32.mrf.mxu0
    %v545 = vadd.f32 %v122, %v544
    %v546 = vpop.f32.mrf.mxu0
    %v547 = vadd.f32 %v122, %v546
    %548 = vmatmul.bf16.gmra.mxu0 %v300
    %v549 = vpop.f32.mrf.mxu0
    %v550 = vadd.f32 %v122, %v549
    %v551 = vpop.f32.mrf.mxu0
    %v552 = vadd.f32 %v122, %v551
    %553 = vmatmul.bf16.gmra.mxu0 %v302
    %v554 = vpop.f32.mrf.mxu0
    %v555 = vadd.f32 %v122, %v554
    %v556 = vpop.f32.mrf.mxu0
    %v557 = vadd.f32 %v122, %v556
    %558 = vmatmul.bf16.gmra.mxu0 %v304
    %v559 = vpop.f32.mrf.mxu0
    %v560 = vadd.f32 %v122, %v559
    %v561 = vpop.f32.mrf.mxu0
    %v562 = vadd.f32 %v122, %v561
    %563 = vmatmul.bf16.gmra.mxu0 %v306
    %v564 = vpop.f32.mrf.mxu0
    %v565 = vadd.f32 %v122, %v564
    %v566 = vpop.f32.mrf.mxu0
    %v567 = vadd.f32 %v122, %v566
    %568 = vmatmul.bf16.gmra.mxu0 %v308
    %v569 = vpop.f32.mrf.mxu0
    %v570 = vadd.f32 %v122, %v569
    %v571 = vpop.f32.mrf.mxu0
    %v572 = vadd.f32 %v122, %v571
    %573 = vmatmul.bf16.gmra.mxu0 %v310
    %v574 = vpop.f32.mrf.mxu0
    %v575 = vadd.f32 %v122, %v574
    %v576 = vpop.f32.mrf.mxu0
    %v577 = vadd.f32 %v122, %v576
    %578 = vmatmul.bf16.gmra.mxu0 %v312
    %v579 = vpop.f32.mrf.mxu0
    %v580 = vadd.f32 %v122, %v579
    %v581 = vpop.f32.mrf.mxu0
    %v582 = vadd.f32 %v122, %v581
    %583 = vmatmul.bf16.gmra.mxu0 %v314
    %v584 = vpop.f32.mrf.mxu0
    %v585 = vadd.f32 %v122, %v584
    %v586 = vpop.f32.mrf.mxu0
    %v587 = vadd.f32 %v122, %v586
    %588 = vdwg.mxu0
    %589 = vmatpush.bf16.msra.mxu0 %v443
    %590 = vmatpush.bf16.msra.mxu0 %v442
    %591 = vmatpush.bf16.msra.mxu0 %v441
    %592 = vmatpush.bf16.msra.mxu0 %v440
    %593 = vmatpush.bf16.msra.mxu0 %v439
    %594 = vmatpush.bf16.msra.mxu0 %v438
    %595 = vmatpush.bf16.msra.mxu0 %v437
    %596 = vmatpush.bf16.msra.mxu0 %v436
    %597 = vmatmul.bf16.gmra.mxu0 %v269
    %v598 = vpop.f32.mrf.mxu0
    %v599 = vadd.f32 %v470, %v598
    %v600 = vpop.f32.mrf.mxu0
    %v601 = vadd.f32 %v472, %v600
    %602 = vmatmul.bf16.gmra.mxu0 %v271
    %v603 = vpop.f32.mrf.mxu0
    %v604 = vadd.f32 %v475, %v603
    %v605 = vpop.f32.mrf.mxu0
    %v606 = vadd.f32 %v477, %v605
    %607 = vmatmul.bf16.gmra.mxu0 %v273
    %v608 = vpop.f32.mrf.mxu0
    %v609 = vadd.f32 %v480, %v608
    %v610 = vpop.f32.mrf.mxu0
    %v611 = vadd.f32 %v482, %v610
    %612 = vmatmul.bf16.gmra.mxu0 %v275
    %v613 = vpop.f32.mrf.mxu0
    %v614 = vadd.f32 %v485, %v613
    %v615 = vpop.f32.mrf.mxu0
    %v616 = vadd.f32 %v487, %v615
    %617 = vmatmul.bf16.gmra.mxu0 %v277
    %v618 = vpop.f32.mrf.mxu0
    %v619 = vadd.f32 %v490, %v618
    %v620 = vpop.f32.mrf.mxu0
    %v621 = vadd.f32 %v492, %v620
    %622 = vmatmul.bf16.gmra.mxu0 %v279
    %v623 = vpop.f32.mrf.mxu0
    %v624 = vadd.f32 %v495, %v623
    %v625 = vpop.f32.mrf.mxu0
    %v626 = vadd.f32 %v497, %v625
    %627 = vmatmul.bf16.gmra.mxu0 %v281
    %v628 = vpop.f32.mrf.mxu0
    %v629 = vadd.f32 %v500, %v628
    %v630 = vpop.f32.mrf.mxu0
    %v631 = vadd.f32 %v502, %v630
    %632 = vmatmul.bf16.gmra.mxu0 %v283
    %v633 = vpop.f32.mrf.mxu0
    %v634 = vadd.f32 %v505, %v633
    %v635 = vpop.f32.mrf.mxu0
    %v636 = vadd.f32 %v507, %v635
    %637 = vmatmul.bf16.gmra.mxu0 %v285
    %v638 = vpop.f32.mrf.mxu0
    %v639 = vadd.f32 %v510, %v638
    %v640 = vpop.f32.mrf.mxu0
    %v641 = vadd.f32 %v512, %v640
    %642 = vmatmul.bf16.gmra.mxu0 %v287
    %v643 = vpop.f32.mrf.mxu0
    %v644 = vadd.f32 %v515, %v643
    %v645 = vpop.f32.mrf.mxu0
    %v646 = vadd.f32 %v517, %v645
    %647 = vmatmul.bf16.gmra.mxu0 %v289
    %v648 = vpop.f32.mrf.mxu0
    %v649 = vadd.f32 %v520, %v648
    %v650 = vpop.f32.mrf.mxu0
    %v651 = vadd.f32 %v522, %v650
    %652 = vmatmul.bf16.gmra.mxu0 %v291
    %v653 = vpop.f32.mrf.mxu0
    %v654 = vadd.f32 %v525, %v653
    %v655 = vpop.f32.mrf.mxu0
    %v656 = vadd.f32 %v527, %v655
    %657 = vmatmul.bf16.gmra.mxu0 %v293
    %v658 = vpop.f32.mrf.mxu0
    %v659 = vadd.f32 %v530, %v658
    %v660 = vpop.f32.mrf.mxu0
    %v661 = vadd.f32 %v532, %v660
    %662 = vmatmul.bf16.gmra.mxu0 %v295
    %v663 = vpop.f32.mrf.mxu0
    %v664 = vadd.f32 %v535, %v663
    %v665 = vpop.f32.mrf.mxu0
    %v666 = vadd.f32 %v537, %v665
    %667 = vmatmul.bf16.gmra.mxu0 %v297
    %v668 = vpop.f32.mrf.mxu0
    %v669 = vadd.f32 %v540, %v668
    %v670 = vpop.f32.mrf.mxu0
    %v671 = vadd.f32 %v542, %v670
    %672 = vmatmul.bf16.gmra.mxu0 %v299
    %v673 = vpop.f32.mrf.mxu0
    %v674 = vadd.f32 %v545, %v673
    %v675 = vpop.f32.mrf.mxu0
    %v676 = vadd.f32 %v547, %v675
    %677 = vmatmul.bf16.gmra.mxu0 %v301
    %v678 = vpop.f32.mrf.mxu0
    %v679 = vadd.f32 %v550, %v678
    %v680 = vpop.f32.mrf.mxu0
    %v681 = vadd.f32 %v552, %v680
    %682 = vmatmul.bf16.gmra.mxu0 %v303
    %v683 = vpop.f32.mrf.mxu0
    %v684 = vadd.f32 %v555, %v683
    %v685 = vpop.f32.mrf.mxu0
    %v686 = vadd.f32 %v557, %v685
    %687 = vmatmul.bf16.gmra.mxu0 %v305
    %v688 = vpop.f32.mrf.mxu0
    %v689 = vadd.f32 %v560, %v688
    %v690 = vpop.f32.mrf.mxu0
    %v691 = vadd.f32 %v562, %v690
    %692 = vmatmul.bf16.gmra.mxu0 %v307
    %v693 = vpop.f32.mrf.mxu0
    %v694 = vadd.f32 %v565, %v693
    %v695 = vpop.f32.mrf.mxu0
    %v696 = vadd.f32 %v567, %v695
    %697 = vmatmul.bf16.gmra.mxu0 %v309
    %v698 = vpop.f32.mrf.mxu0
    %v699 = vadd.f32 %v570, %v698
    %v700 = vpop.f32.mrf.mxu0
    %v701 = vadd.f32 %v572, %v700
    %702 = vmatmul.bf16.gmra.mxu0 %v311
    %v703 = vpop.f32.mrf.mxu0
    %v704 = vadd.f32 %v575, %v703
    %v705 = vpop.f32.mrf.mxu0
    %v706 = vadd.f32 %v577, %v705
    %707 = vmatmul.bf16.gmra.mxu0 %v313
    %v708 = vpop.f32.mrf.mxu0
    %v709 = vadd.f32 %v580, %v708
    %v710 = vpop.f32.mrf.mxu0
    %v711 = vadd.f32 %v582, %v710
    %712 = vmatmul.bf16.gmra.mxu0 %v315
    %v713 = vpop.f32.mrf.mxu0
    %v714 = vadd.f32 %v585, %v713
    %v715 = vpop.f32.mrf.mxu0
    %v716 = vadd.f32 %v587, %v715
    %717 = vdwg.mxu0
    %v718 = vmax.f32 %v599, 0.0
    %v719 = vmax.f32 %v601, 0.0
    %v720 = vmax.f32 %v604, 0.0
    %v721 = vmax.f32 %v606, 0.0
    %v722 = vmax.f32 %v609, 0.0
    %v723 = vmax.f32 %v611, 0.0
    %v724 = vmax.f32 %v614, 0.0
    %v725 = vmax.f32 %v616, 0.0
    %v726 = vmax.f32 %v619, 0.0
    %v727 = vmax.f32 %v621, 0.0
    %v728 = vmax.f32 %v624, 0.0
    %v729 = vmax.f32 %v626, 0.0
    %v730 = vmax.f32 %v629, 0.0
    %v731 = vmax.f32 %v631, 0.0
    %v732 = vmax.f32 %v634, 0.0
    %v733 = vmax.f32 %v636, 0.0
    %v734 = vmax.f32 %v639, 0.0
    %v735 = vmax.f32 %v641, 0.0
    %v736 = vmax.f32 %v644, 0.0
    %v737 = vmax.f32 %v646, 0.0
    %v738 = vmax.f32 %v649, 0.0
    %v739 = vmax.f32 %v651, 0.0
    %v740 = vmax.f32 %v654, 0.0
    %v741 = vmax.f32 %v656, 0.0
    %v742 = vmax.f32 %v659, 0.0
    %v743 = vmax.f32 %v661, 0.0
    %v744 = vmax.f32 %v664, 0.0
    %v745 = vmax.f32 %v666, 0.0
    %v746 = vmax.f32 %v669, 0.0
    %v747 = vmax.f32 %v671, 0.0
    %v748 = vmax.f32 %v674, 0.0
    %v749 = vmax.f32 %v676, 0.0
    %v750 = vmax.f32 %v679, 0.0
    %v751 = vmax.f32 %v681, 0.0
    %v752 = vmax.f32 %v684, 0.0
    %v753 = vmax.f32 %v686, 0.0
    %v754 = vmax.f32 %v689, 0.0
    %v755 = vmax.f32 %v691, 0.0
    %v756 = vmax.f32 %v694, 0.0
    %v757 = vmax.f32 %v696, 0.0
    %v758 = vmax.f32 %v699, 0.0
    %v759 = vmax.f32 %v701, 0.0
    %v760 = vmax.f32 %v704, 0.0
    %v761 = vmax.f32 %v706, 0.0
    %v762 = vmax.f32 %v709, 0.0
    %v763 = vmax.f32 %v711, 0.0
    %v764 = vmax.f32 %v714, 0.0
    %v765 = vmax.f32 %v716, 0.0
    %769 = vrot.lane.b32.xlu0 %v721, 32
    %v770 = vpop.permute.xlu0 %769
    %771 = vrot.lane.b32.xlu0 %v722, 32
    %v772 = vpop.permute.xlu0 %771
    %773 = vrot.lane.b32.xlu0 %v723, 32
    %v774 = vpop.permute.xlu0 %773
    %781 = vrot.lane.b32.xlu0 %v724, 64
    %v782 = vpop.permute.xlu0 %781
    %783 = vrot.lane.b32.xlu0 %v725, 64
    %v784 = vpop.permute.xlu0 %783
    %785 = vrot.lane.b32.xlu0 %v726, 64
    %v786 = vpop.permute.xlu0 %785
    %793 = vrot.lane.b32.xlu0 %v727, 96
    %v794 = vpop.permute.xlu0 %793
    %795 = vrot.lane.b32.xlu0 %v728, 96
    %v796 = vpop.permute.xlu0 %795
    %797 = vrot.lane.b32.xlu0 %v729, 96
    %v798 = vpop.permute.xlu0 %797
    %805 = vrot.lane.b32.xlu0 %v733, 32
    %v806 = vpop.permute.xlu0 %805
    %807 = vrot.lane.b32.xlu0 %v734, 32
    %v808 = vpop.permute.xlu0 %807
    %809 = vrot.lane.b32.xlu0 %v735, 32
    %v810 = vpop.permute.xlu0 %809
    %817 = vrot.lane.b32.xlu0 %v736, 64
    %v818 = vpop.permute.xlu0 %817
    %819 = vrot.lane.b32.xlu0 %v737, 64
    %v820 = vpop.permute.xlu0 %819
    %821 = vrot.lane.b32.xlu0 %v738, 64
    %v822 = vpop.permute.xlu0 %821
    %829 = vrot.lane.b32.xlu0 %v739, 96
    %v830 = vpop.permute.xlu0 %829
    %831 = vrot.lane.b32.xlu0 %v740, 96
    %v832 = vpop.permute.xlu0 %831
    %833 = vrot.lane.b32.xlu0 %v741, 96
    %v834 = vpop.permute.xlu0 %833
    %841 = vrot.lane.b32.xlu0 %v745, 32
    %v842 = vpop.permute.xlu0 %841
    %843 = vrot.lane.b32.xlu0 %v746, 32
    %v844 = vpop.permute.xlu0 %843
    %845 = vrot.lane.b32.xlu0 %v747, 32
    %v846 = vpop.permute.xlu0 %845
    %853 = vrot.lane.b32.xlu0 %v748, 64
    %v854 = vpop.permute.xlu0 %853
    %855 = vrot.lane.b32.xlu0 %v749, 64
    %v856 = vpop.permute.xlu0 %855
    %857 = vrot.lane.b32.xlu0 %v750, 64
    %v858 = vpop.permute.xlu0 %857
    %865 = vrot.lane.b32.xlu0 %v751, 96
    %v866 = vpop.permute.xlu0 %865
    %867 = vrot.lane.b32.xlu0 %v752, 96
    %v868 = vpop.permute.xlu0 %867
    %869 = vrot.lane.b32.xlu0 %v753, 96
    %v870 = vpop.permute.xlu0 %869
    %877 = vrot.lane.b32.xlu0 %v757, 32
    %v878 = vpop.permute.xlu0 %877
    %879 = vrot.lane.b32.xlu0 %v758, 32
    %v880 = vpop.permute.xlu0 %879
    %881 = vrot.lane.b32.xlu0 %v759, 32
    %v882 = vpop.permute.xlu0 %881
    %889 = vrot.lane.b32.xlu0 %v760, 64
    %v890 = vpop.permute.xlu0 %889
    %891 = vrot.lane.b32.xlu0 %v761, 64
    %v892 = vpop.permute.xlu0 %891
    %893 = vrot.lane.b32.xlu0 %v762, 64
    %v894 = vpop.permute.xlu0 %893
    %901 = vrot.lane.b32.xlu0 %v763, 96
    %v902 = vpop.permute.xlu0 %901
    %903 = vrot.lane.b32.xlu0 %v764, 96
    %v904 = vpop.permute.xlu0 %903
    %905 = vrot.lane.b32.xlu0 %v765, 96
    %v906 = vpop.permute.xlu0 %905
    %vm910 = vcmask 261120
    %v911 = vsel %vm910, %v718, %v770
    %v912 = vsel %vm910, %v719, %v772
    %v913 = vsel %vm910, %v720, %v774
    %vm914 = vcmask 523264
    %v915 = vsel %vm914, %v911, %v782
    %v916 = vsel %vm914, %v912, %v784
    %v917 = vsel %vm914, %v913, %v786
    %vm918 = vcmask 785408
    %v919 = vsel %vm918, %v915, %v794
    %v920 = vsel %vm918, %v916, %v796
    %v921 = vsel %vm918, %v917, %v798
    %v922 = vsel %vm910, %v730, %v806
    %v923 = vsel %vm910, %v731, %v808
    %v924 = vsel %vm910, %v732, %v810
    %v925 = vsel %vm914, %v922, %v818
    %v926 = vsel %vm914, %v923, %v820
    %v927 = vsel %vm914, %v924, %v822
    %v928 = vsel %vm918, %v925, %v830
    %v929 = vsel %vm918, %v926, %v832
    %v930 = vsel %vm918, %v927, %v834
    %v931 = vsel %vm910, %v742, %v842
    %v932 = vsel %vm910, %v743, %v844
    %v933 = vsel %vm910, %v744, %v846
    %v934 = vsel %vm914, %v931, %v854
    %v935 = vsel %vm914, %v932, %v856
    %v936 = vsel %vm914, %v933, %v858
    %v937 = vsel %vm918, %v934, %v866
    %v938 = vsel %vm918, %v935, %v868
    %v939 = vsel %vm918, %v936, %v870
    %v940 = vsel %vm910, %v754, %v878
    %v941 = vsel %vm910, %v755, %v880
    %v942 = vsel %vm910, %v756, %v882
    %v943 = vsel %vm914, %v940, %v890
    %v944 = vsel %vm914, %v941, %v892
    %v945 = vsel %vm914, %v942, %v894
    %v946 = vsel %vm918, %v943, %v902
    %v947 = vsel %vm918, %v944, %v904
    %v948 = vsel %vm918, %v945, %v906
    %v949 = vpack.c.bf16 %v920, %v919
    %v950 = vpack.c.bf16 %v929, %v928
    %v951 = vpack.c.bf16 %v938, %v937
    %v952 = vpack.c.bf16 %v947, %v946
    %v953 = vpack.c.bf16 %v921, %v921
    %v954 = vpack.c.bf16 %v930, %v930
    %v955 = vpack.c.bf16 %v939, %v939
    %v956 = vpack.c.bf16 %v948, %v948
    %v957 = vld [vmem:[%s3] sm:$0xf]
    %v958 = vld [vmem:[%s3 + $0x4] sm:$0xf]
    %v959 = vld [vmem:[%s3 + $0x8] sm:$0xf]
    %v960 = vld [vmem:[%s3 + $0xc] sm:$0xf]
    %v961 = vld [vmem:[%s3 + $0x10] sm:$0xf]
    %v962 = vld [vmem:[%s3 + $0x14] sm:$0xf]
    %v963 = vld [vmem:[%s3 + $0x18] sm:$0xf]
    %v964 = vld [vmem:[%s3 + $0x1c] sm:$0xf]
    %v965 = vld [vmem:[%s3 + $0x20] sm:$0xf]
    %v966 = vld [vmem:[%s3 + $0x24] sm:$0xf]
    %v967 = vld [vmem:[%s3 + $0x28] sm:$0xf]
    %v968 = vld [vmem:[%s3 + $0x2c] sm:$0xf]
    %v969 = vld [vmem:[%s3 + $0x30] sm:$0xf]
    %v970 = vld [vmem:[%s3 + $0x34] sm:$0xf]
    %v971 = vld [vmem:[%s3 + $0x38] sm:$0xf]
    %v972 = vld [vmem:[%s3 + $0x3c] sm:$0xf]
    %v973 = vld [vmem:[%s3 + $0x40] sm:$0xf]
    %v974 = vld [vmem:[%s3 + $0x44] sm:$0xf]
    %v975 = vld [vmem:[%s3 + $0x48] sm:$0xf]
    %v976 = vld [vmem:[%s3 + $0x4c] sm:$0xf]
    %v977 = vld [vmem:[%s3 + $0x50] sm:$0xf]
    %v978 = vld [vmem:[%s3 + $0x54] sm:$0xf]
    %v979 = vld [vmem:[%s3 + $0x58] sm:$0xf]
    %v980 = vld [vmem:[%s3 + $0x5c] sm:$0xf]
    %v981 = vld [vmem:[%s3 + $0x60] sm:$0xf]
    %v982 = vld [vmem:[%s3 + $0x64] sm:$0xf]
    %v983 = vld [vmem:[%s3 + $0x68] sm:$0xf]
    %v984 = vld [vmem:[%s3 + $0x6c] sm:$0xf]
    %v985 = vld [vmem:[%s3 + $0x70] sm:$0xf]
    %v986 = vld [vmem:[%s3 + $0x74] sm:$0xf]
    %v987 = vld [vmem:[%s3 + $0x78] sm:$0xf]
    %v988 = vld [vmem:[%s3 + $0x7c] sm:$0xf]
    %v989 = vld [vmem:[%s3 + $0x80] sm:$0xf]
    %v990 = vld [vmem:[%s3 + $0x84] sm:$0xf]
    %v991 = vld [vmem:[%s3 + $0x88] sm:$0xf]
    %v992 = vld [vmem:[%s3 + $0x8c] sm:$0xf]
    %v993 = vld [vmem:[%s3 + $0x90] sm:$0xf]
    %v994 = vld [vmem:[%s3 + $0x94] sm:$0xf]
    %v995 = vld [vmem:[%s3 + $0x98] sm:$0xf]
    %v996 = vld [vmem:[%s3 + $0x9c] sm:$0xf]
    %v997 = vld [vmem:[%s3 + $0xa0] sm:$0xf]
    %v998 = vld [vmem:[%s3 + $0xa4] sm:$0xf]
    %v999 = vld [vmem:[%s3 + $0xa8] sm:$0xf]
    %v1000 = vld [vmem:[%s3 + $0xac] sm:$0xf]
    %v1001 = vld [vmem:[%s3 + $0xb0] sm:$0xf]
    %v1002 = vld [vmem:[%s3 + $0xb4] sm:$0xf]
    %v1003 = vld [vmem:[%s3 + $0xb8] sm:$0xf]
    %v1004 = vld [vmem:[%s3 + $0xbc] sm:$0xf]
    %v1005 = vld [vmem:[%s3 + $0xc0] sm:$0xf]
    %v1006 = vld [vmem:[%s3 + $0xc4] sm:$0xf]
    %v1007 = vld [vmem:[%s3 + $0xc8] sm:$0xf]
    %v1008 = vld [vmem:[%s3 + $0xcc] sm:$0xf]
    %v1009 = vld [vmem:[%s3 + $0xd0] sm:$0xf]
    %v1010 = vld [vmem:[%s3 + $0xd4] sm:$0xf]
    %v1011 = vld [vmem:[%s3 + $0xd8] sm:$0xf]
    %v1012 = vld [vmem:[%s3 + $0xdc] sm:$0xf]
    %v1013 = vld [vmem:[%s3 + $0xe0] sm:$0xf]
    %v1014 = vld [vmem:[%s3 + $0xe4] sm:$0xf]
    %v1015 = vld [vmem:[%s3 + $0xe8] sm:$0xf]
    %v1016 = vld [vmem:[%s3 + $0xec] sm:$0xf]
    %v1017 = vld [vmem:[%s3 + $0xf0] sm:$0xf]
    %v1018 = vld [vmem:[%s3 + $0xf4] sm:$0xf]
    %v1019 = vld [vmem:[%s3 + $0xf8] sm:$0xf]
    %v1020 = vld [vmem:[%s3 + $0xfc] sm:$0xf]
    %v1021 = vld [vmem:[%s4] sm:$0x1]
    %v1023 = vperm.slane %v1021, 0
    %v1089 = vunpack.c.l.b16 %v957
    %v1090 = vunpack.c.l.b16 %v958
    %v1091 = vunpack.c.l.b16 %v959
    %v1092 = vunpack.c.l.b16 %v960
    %v1093 = vunpack.c.l.b16 %v961
    %v1094 = vunpack.c.l.b16 %v962
    %v1095 = vunpack.c.l.b16 %v963
    %v1096 = vunpack.c.l.b16 %v964
    %v1097 = vunpack.c.l.b16 %v965
    %v1098 = vunpack.c.l.b16 %v966
    %v1099 = vunpack.c.l.b16 %v967
    %v1100 = vunpack.c.l.b16 %v968
    %v1101 = vunpack.c.l.b16 %v969
    %v1102 = vunpack.c.l.b16 %v970
    %v1103 = vunpack.c.l.b16 %v971
    %v1104 = vunpack.c.l.b16 %v972
    %v1105 = vunpack.c.l.b16 %v973
    %v1106 = vunpack.c.l.b16 %v974
    %v1107 = vunpack.c.l.b16 %v975
    %v1108 = vunpack.c.l.b16 %v976
    %v1109 = vunpack.c.l.b16 %v977
    %v1110 = vunpack.c.l.b16 %v978
    %v1111 = vunpack.c.l.b16 %v979
    %v1112 = vunpack.c.l.b16 %v980
    %v1113 = vunpack.c.l.b16 %v981
    %v1114 = vunpack.c.l.b16 %v982
    %v1115 = vunpack.c.l.b16 %v983
    %v1116 = vunpack.c.l.b16 %v984
    %v1117 = vunpack.c.l.b16 %v985
    %v1118 = vunpack.c.l.b16 %v986
    %v1119 = vunpack.c.l.b16 %v987
    %v1120 = vunpack.c.l.b16 %v988
    %v1121 = vunpack.c.l.b16 %v989
    %v1122 = vunpack.c.l.b16 %v990
    %v1123 = vunpack.c.l.b16 %v991
    %v1124 = vunpack.c.l.b16 %v992
    %v1125 = vunpack.c.l.b16 %v993
    %v1126 = vunpack.c.l.b16 %v994
    %v1127 = vunpack.c.l.b16 %v995
    %v1128 = vunpack.c.l.b16 %v996
    %v1129 = vunpack.c.l.b16 %v997
    %v1130 = vunpack.c.l.b16 %v998
    %v1131 = vunpack.c.l.b16 %v999
    %v1132 = vunpack.c.l.b16 %v1000
    %v1133 = vunpack.c.l.b16 %v1001
    %v1134 = vunpack.c.l.b16 %v1002
    %v1135 = vunpack.c.l.b16 %v1003
    %v1136 = vunpack.c.l.b16 %v1004
    %v1137 = vunpack.c.l.b16 %v1005
    %v1138 = vunpack.c.l.b16 %v1006
    %v1139 = vunpack.c.l.b16 %v1007
    %v1140 = vunpack.c.l.b16 %v1008
    %v1141 = vunpack.c.l.b16 %v1009
    %v1142 = vunpack.c.l.b16 %v1010
    %v1143 = vunpack.c.l.b16 %v1011
    %v1144 = vunpack.c.l.b16 %v1012
    %v1145 = vunpack.c.l.b16 %v1013
    %v1146 = vunpack.c.l.b16 %v1014
    %v1147 = vunpack.c.l.b16 %v1015
    %v1148 = vunpack.c.l.b16 %v1016
    %v1149 = vunpack.c.l.b16 %v1017
    %v1150 = vunpack.c.l.b16 %v1018
    %v1151 = vunpack.c.l.b16 %v1019
    %v1152 = vunpack.c.l.b16 %v1020
    %v1153 = vpack.c.b16 %v1090, %v1089
    %v1154 = vpack.c.b16 %v1092, %v1091
    %v1155 = vpack.c.b16 %v1094, %v1093
    %v1156 = vpack.c.b16 %v1096, %v1095
    %v1157 = vpack.c.b16 %v1098, %v1097
    %v1158 = vpack.c.b16 %v1100, %v1099
    %v1159 = vpack.c.b16 %v1102, %v1101
    %v1160 = vpack.c.b16 %v1104, %v1103
    %v1161 = vpack.c.b16 %v1106, %v1105
    %v1162 = vpack.c.b16 %v1108, %v1107
    %v1163 = vpack.c.b16 %v1110, %v1109
    %v1164 = vpack.c.b16 %v1112, %v1111
    %v1165 = vpack.c.b16 %v1114, %v1113
    %v1166 = vpack.c.b16 %v1116, %v1115
    %v1167 = vpack.c.b16 %v1118, %v1117
    %v1168 = vpack.c.b16 %v1120, %v1119
    %v1169 = vpack.c.b16 %v1122, %v1121
    %v1170 = vpack.c.b16 %v1124, %v1123
    %v1171 = vpack.c.b16 %v1126, %v1125
    %v1172 = vpack.c.b16 %v1128, %v1127
    %v1173 = vpack.c.b16 %v1130, %v1129
    %v1174 = vpack.c.b16 %v1132, %v1131
    %v1175 = vpack.c.b16 %v1134, %v1133
    %v1176 = vpack.c.b16 %v1136, %v1135
    %v1177 = vpack.c.b16 %v1138, %v1137
    %v1178 = vpack.c.b16 %v1140, %v1139
    %v1179 = vpack.c.b16 %v1142, %v1141
    %v1180 = vpack.c.b16 %v1144, %v1143
    %v1181 = vpack.c.b16 %v1146, %v1145
    %v1182 = vpack.c.b16 %v1148, %v1147
    %v1183 = vpack.c.b16 %v1150, %v1149
    %v1184 = vpack.c.b16 %v1152, %v1151
    %1217 = vmatpush.bf16.msra.mxu0 %v1160
    %1218 = vmatpush.bf16.msra.mxu0 %v1159
    %1219 = vmatpush.bf16.msra.mxu0 %v1158
    %1220 = vmatpush.bf16.msra.mxu0 %v1157
    %1221 = vmatpush.bf16.msra.mxu0 %v1156
    %1222 = vmatpush.bf16.msra.mxu0 %v1155
    %1223 = vmatpush.bf16.msra.mxu0 %v1154
    %1224 = vmatpush.bf16.msra.mxu0 %v1153
    %1225 = vmatmul.bf16.gmra.mxu0 %v949
    %v1226 = vpop.f32.mrf.mxu0
    %v1227 = vadd.f32 %v1023, %v1226
    %v1228 = vpop.f32.mrf.mxu0
    %v1229 = vadd.f32 %v1023, %v1228
    %1230 = vmatmul.bf16.gmra.mxu0 %v953
    %v1231 = vpop.f32.mrf.mxu0
    %v1232 = vadd.f32 %v1023, %v1231
    %v1233 = vpop.f32.mrf.mxu0
    %1234 = vdwg.mxu0
    %1235 = vmatpush.bf16.msra.mxu0 %v1168
    %1236 = vmatpush.bf16.msra.mxu0 %v1167
    %1237 = vmatpush.bf16.msra.mxu0 %v1166
    %1238 = vmatpush.bf16.msra.mxu0 %v1165
    %1239 = vmatpush.bf16.msra.mxu0 %v1164
    %1240 = vmatpush.bf16.msra.mxu0 %v1163
    %1241 = vmatpush.bf16.msra.mxu0 %v1162
    %1242 = vmatpush.bf16.msra.mxu0 %v1161
    %1243 = vmatmul.bf16.gmra.mxu0 %v950
    %v1244 = vpop.f32.mrf.mxu0
    %v1245 = vadd.f32 %v1227, %v1244
    %v1246 = vpop.f32.mrf.mxu0
    %v1247 = vadd.f32 %v1229, %v1246
    %1248 = vmatmul.bf16.gmra.mxu0 %v954
    %v1249 = vpop.f32.mrf.mxu0
    %v1250 = vadd.f32 %v1232, %v1249
    %v1251 = vpop.f32.mrf.mxu0
    %1252 = vdwg.mxu0
    %1253 = vmatpush.bf16.msra.mxu0 %v1176
    %1254 = vmatpush.bf16.msra.mxu0 %v1175
    %1255 = vmatpush.bf16.msra.mxu0 %v1174
    %1256 = vmatpush.bf16.msra.mxu0 %v1173
    %1257 = vmatpush.bf16.msra.mxu0 %v1172
    %1258 = vmatpush.bf16.msra.mxu0 %v1171
    %1259 = vmatpush.bf16.msra.mxu0 %v1170
    %1260 = vmatpush.bf16.msra.mxu0 %v1169
    %1261 = vmatmul.bf16.gmra.mxu0 %v951
    %v1262 = vpop.f32.mrf.mxu0
    %v1263 = vadd.f32 %v1245, %v1262
    %v1264 = vpop.f32.mrf.mxu0
    %v1265 = vadd.f32 %v1247, %v1264
    %1266 = vmatmul.bf16.gmra.mxu0 %v955
    %v1267 = vpop.f32.mrf.mxu0
    %v1268 = vadd.f32 %v1250, %v1267
    %v1269 = vpop.f32.mrf.mxu0
    %1270 = vdwg.mxu0
    %1271 = vmatpush.bf16.msra.mxu0 %v1184
    %1272 = vmatpush.bf16.msra.mxu0 %v1183
    %1273 = vmatpush.bf16.msra.mxu0 %v1182
    %1274 = vmatpush.bf16.msra.mxu0 %v1181
    %1275 = vmatpush.bf16.msra.mxu0 %v1180
    %1276 = vmatpush.bf16.msra.mxu0 %v1179
    %1277 = vmatpush.bf16.msra.mxu0 %v1178
    %1278 = vmatpush.bf16.msra.mxu0 %v1177
    %1279 = vmatmul.bf16.gmra.mxu0 %v952
    %v1280 = vpop.f32.mrf.mxu0
    %v1281 = vadd.f32 %v1263, %v1280
    %v1282 = vpop.f32.mrf.mxu0
    %v1283 = vadd.f32 %v1265, %v1282
    %1284 = vmatmul.bf16.gmra.mxu0 %v956
    %v1285 = vpop.f32.mrf.mxu0
    %v1286 = vadd.f32 %v1268, %v1285
    %v1287 = vpop.f32.mrf.mxu0
    %1288 = vdwg.mxu0
    %v1289 = vmax.f32 %v1281, 0.0
    %v1290 = vmax.f32 %v1283, 0.0
    %v1291 = vmax.f32 %v1286, 0.0
    %v1293 = vrot.slane %v1289, 2
    %1294 = vrot.lane.b32.xlu0 %v1293, 64
    %v1295 = vpop.permute.xlu0 %1294
    %v1297 = vrot.slane %v1289, 4
    %v1299 = vrot.slane %v1289, 6
    %1300 = vrot.lane.b32.xlu0 %v1299, 64
    %v1301 = vpop.permute.xlu0 %1300
    %v1304 = vrot.slane %v1290, 2
    %1305 = vrot.lane.b32.xlu0 %v1304, 64
    %v1306 = vpop.permute.xlu0 %1305
    %v1308 = vrot.slane %v1290, 4
    %v1310 = vrot.slane %v1290, 6
    %1311 = vrot.lane.b32.xlu0 %v1310, 64
    %v1312 = vpop.permute.xlu0 %1311
    %v1314 = vsel %vm914, %v1289, %v1295
    %v1315 = vsel %vm914, %v1297, %v1301
    %v1316 = vsel %vm914, %v1290, %v1306
    %v1317 = vsel %vm914, %v1308, %v1312
    %v1318 = vpack.c.bf16 %v1314, %v1314
    %v1319 = vpack.c.bf16 %v1315, %v1315
    %v1320 = vpack.c.bf16 %v1316, %v1316
    %v1321 = vpack.c.bf16 %v1317, %v1317
    %v1322 = vpack.c.bf16 %v1291, %v1291
    %v1323 = vld [vmem:[%s5] sm:$0xf]
    %v1324 = vld [vmem:[%s5 + $0x4] sm:$0xf]
    %v1325 = vld [vmem:[%s5 + $0x8] sm:$0xf]
    %v1326 = vld [vmem:[%s5 + $0xc] sm:$0xf]
    %v1327 = vld [vmem:[%s5 + $0x10] sm:$0xf]
    %v1328 = vld [vmem:[%s5 + $0x14] sm:$0xf]
    %v1329 = vld [vmem:[%s5 + $0x18] sm:$0xf]
    %v1330 = vld [vmem:[%s5 + $0x1c] sm:$0xf]
    %v1331 = vld [vmem:[%s5 + $0x20] sm:$0xf]
    %v1332 = vld [vmem:[%s5 + $0x24] sm:$0xf]
    %v1333 = vld [vmem:[%s5 + $0x28] sm:$0xf]
    %v1334 = vld [vmem:[%s5 + $0x2c] sm:$0xf]
    %v1335 = vld [vmem:[%s5 + $0x30] sm:$0xf]
    %v1336 = vld [vmem:[%s5 + $0x34] sm:$0xf]
    %v1337 = vld [vmem:[%s5 + $0x38] sm:$0xf]
    %v1338 = vld [vmem:[%s5 + $0x3c] sm:$0xf]
    %v1339 = vld [vmem:[%s5 + $0x40] sm:$0xf]
    %v1340 = vld [vmem:[%s5 + $0x44] sm:$0xf]
    %v1341 = vld [vmem:[%s5 + $0x48] sm:$0xf]
    %v1342 = vld [vmem:[%s5 + $0x4c] sm:$0xf]
    %v1343 = vld [vmem:[%s5 + $0x50] sm:$0xf]
    %v1344 = vld [vmem:[%s5 + $0x54] sm:$0xf]
    %v1345 = vld [vmem:[%s5 + $0x58] sm:$0xf]
    %v1346 = vld [vmem:[%s5 + $0x5c] sm:$0xf]
    %v1347 = vld [vmem:[%s5 + $0x60] sm:$0xf]
    %v1348 = vld [vmem:[%s5 + $0x64] sm:$0xf]
    %v1349 = vld [vmem:[%s5 + $0x68] sm:$0xf]
    %v1350 = vld [vmem:[%s5 + $0x6c] sm:$0xf]
    %v1351 = vld [vmem:[%s5 + $0x70] sm:$0xf]
    %v1352 = vld [vmem:[%s5 + $0x74] sm:$0xf]
    %v1353 = vld [vmem:[%s5 + $0x78] sm:$0xf]
    %v1354 = vld [vmem:[%s5 + $0x7c] sm:$0xf]
    %v1355 = vld [vmem:[%s5 + $0x80] sm:$0xf]
    %v1356 = vld [vmem:[%s5 + $0x84] sm:$0xf]
    %v1357 = vld [vmem:[%s5 + $0x88] sm:$0xf]
    %v1358 = vld [vmem:[%s5 + $0x8c] sm:$0xf]
    %v1359 = vld [vmem:[%s5 + $0x90] sm:$0xf]
    %v1360 = vld [vmem:[%s5 + $0x94] sm:$0xf]
    %v1361 = vld [vmem:[%s5 + $0x98] sm:$0xf]
    %v1362 = vld [vmem:[%s5 + $0x9c] sm:$0xf]
    %v1363 = vld [vmem:[%s5 + $0xa0] sm:$0xf]
    %v1364 = vld [vmem:[%s5 + $0xa4] sm:$0xf]
    %v1365 = vld [vmem:[%s5 + $0xa8] sm:$0xf]
    %v1366 = vld [vmem:[%s5 + $0xac] sm:$0xf]
    %v1367 = vld [vmem:[%s5 + $0xb0] sm:$0xf]
    %v1368 = vld [vmem:[%s5 + $0xb4] sm:$0xf]
    %v1369 = vld [vmem:[%s5 + $0xb8] sm:$0xf]
    %v1370 = vld [vmem:[%s5 + $0xbc] sm:$0xf]
    %v1371 = vld [vmem:[%s5 + $0xc0] sm:$0xf]
    %v1372 = vld [vmem:[%s5 + $0xc4] sm:$0xf]
    %v1373 = vld [vmem:[%s5 + $0xc8] sm:$0xf]
    %v1374 = vld [vmem:[%s5 + $0xcc] sm:$0xf]
    %v1375 = vld [vmem:[%s5 + $0xd0] sm:$0xf]
    %v1376 = vld [vmem:[%s5 + $0xd4] sm:$0xf]
    %v1377 = vld [vmem:[%s5 + $0xd8] sm:$0xf]
    %v1378 = vld [vmem:[%s5 + $0xdc] sm:$0xf]
    %v1379 = vld [vmem:[%s5 + $0xe0] sm:$0xf]
    %v1380 = vld [vmem:[%s5 + $0xe4] sm:$0xf]
    %v1381 = vld [vmem:[%s5 + $0xe8] sm:$0xf]
    %v1382 = vld [vmem:[%s5 + $0xec] sm:$0xf]
    %v1383 = vld [vmem:[%s5 + $0xf0] sm:$0xf]
    %v1384 = vld [vmem:[%s5 + $0xf4] sm:$0xf]
    %v1385 = vld [vmem:[%s5 + $0xf8] sm:$0xf]
    %v1386 = vld [vmem:[%s5 + $0xfc] sm:$0xf]
    %v1387 = vld [vmem:[%s5 + $0x100] sm:$0xf]
    %v1388 = vld [vmem:[%s5 + $0x104] sm:$0xf]
    %v1389 = vld [vmem:[%s5 + $0x108] sm:$0xf]
    %v1390 = vld [vmem:[%s5 + $0x10c] sm:$0xf]
    %v1391 = vld [vmem:[%s5 + $0x110] sm:$0xf]
    %v1392 = vld [vmem:[%s5 + $0x114] sm:$0xf]
    %v1393 = vld [vmem:[%s5 + $0x118] sm:$0xf]
    %v1394 = vld [vmem:[%s5 + $0x11c] sm:$0xf]
    %v1395 = vld [vmem:[%s6] sm:$0x1]
    %v1397 = vperm.slane %v1395, 0
    %v1471 = vunpack.c.l.b16 %v1323
    %v1472 = vunpack.c.l.b16 %v1324
    %v1473 = vunpack.c.l.b16 %v1325
    %v1474 = vunpack.c.l.b16 %v1326
    %v1475 = vunpack.c.l.b16 %v1327
    %v1476 = vunpack.c.l.b16 %v1328
    %v1477 = vunpack.c.l.b16 %v1329
    %v1478 = vunpack.c.l.b16 %v1330
    %v1479 = vunpack.c.l.b16 %v1331
    %v1480 = vunpack.c.l.b16 %v1332
    %v1481 = vunpack.c.l.b16 %v1333
    %v1482 = vunpack.c.l.b16 %v1334
    %v1483 = vunpack.c.l.b16 %v1335
    %v1484 = vunpack.c.l.b16 %v1336
    %v1485 = vunpack.c.l.b16 %v1337
    %v1486 = vunpack.c.l.b16 %v1338
    %v1487 = vunpack.c.l.b16 %v1339
    %v1488 = vunpack.c.l.b16 %v1340
    %v1489 = vunpack.c.l.b16 %v1341
    %v1490 = vunpack.c.l.b16 %v1342
    %v1491 = vunpack.c.l.b16 %v1343
    %v1492 = vunpack.c.l.b16 %v1344
    %v1493 = vunpack.c.l.b16 %v1345
    %v1494 = vunpack.c.l.b16 %v1346
    %v1495 = vunpack.c.l.b16 %v1347
    %v1496 = vunpack.c.l.b16 %v1348
    %v1497 = vunpack.c.l.b16 %v1349
    %v1498 = vunpack.c.l.b16 %v1350
    %v1499 = vunpack.c.l.b16 %v1351
    %v1500 = vunpack.c.l.b16 %v1352
    %v1501 = vunpack.c.l.b16 %v1353
    %v1502 = vunpack.c.l.b16 %v1354
    %v1503 = vunpack.c.l.b16 %v1355
    %v1504 = vunpack.c.l.b16 %v1356
    %v1505 = vunpack.c.l.b16 %v1357
    %v1506 = vunpack.c.l.b16 %v1358
    %v1507 = vunpack.c.l.b16 %v1359
    %v1508 = vunpack.c.l.b16 %v1360
    %v1509 = vunpack.c.l.b16 %v1361
    %v1510 = vunpack.c.l.b16 %v1362
    %v1511 = vunpack.c.l.b16 %v1363
    %v1512 = vunpack.c.l.b16 %v1364
    %v1513 = vunpack.c.l.b16 %v1365
    %v1514 = vunpack.c.l.b16 %v1366
    %v1515 = vunpack.c.l.b16 %v1367
    %v1516 = vunpack.c.l.b16 %v1368
    %v1517 = vunpack.c.l.b16 %v1369
    %v1518 = vunpack.c.l.b16 %v1370
    %v1519 = vunpack.c.l.b16 %v1371
    %v1520 = vunpack.c.l.b16 %v1372
    %v1521 = vunpack.c.l.b16 %v1373
    %v1522 = vunpack.c.l.b16 %v1374
    %v1523 = vunpack.c.l.b16 %v1375
    %v1524 = vunpack.c.l.b16 %v1376
    %v1525 = vunpack.c.l.b16 %v1377
    %v1526 = vunpack.c.l.b16 %v1378
    %v1527 = vunpack.c.l.b16 %v1379
    %v1528 = vunpack.c.l.b16 %v1380
    %v1529 = vunpack.c.l.b16 %v1381
    %v1530 = vunpack.c.l.b16 %v1382
    %v1531 = vunpack.c.l.b16 %v1383
    %v1532 = vunpack.c.l.b16 %v1384
    %v1533 = vunpack.c.l.b16 %v1385
    %v1534 = vunpack.c.l.b16 %v1386
    %v1535 = vunpack.c.l.b16 %v1387
    %v1536 = vunpack.c.l.b16 %v1388
    %v1537 = vunpack.c.l.b16 %v1389
    %v1538 = vunpack.c.l.b16 %v1390
    %v1539 = vunpack.c.l.b16 %v1391
    %v1540 = vunpack.c.l.b16 %v1392
    %v1541 = vunpack.c.l.b16 %v1393
    %v1542 = vunpack.c.l.b16 %v1394
    %v1543 = vpack.c.b16 %v1472, %v1471
    %v1544 = vpack.c.b16 %v1474, %v1473
    %v1545 = vpack.c.b16 %v1476, %v1475
    %v1546 = vpack.c.b16 %v1478, %v1477
    %v1547 = vpack.c.b16 %v1480, %v1479
    %v1548 = vpack.c.b16 %v1482, %v1481
    %v1549 = vpack.c.b16 %v1484, %v1483
    %v1550 = vpack.c.b16 %v1486, %v1485
    %v1551 = vpack.c.b16 %v1488, %v1487
    %v1552 = vpack.c.b16 %v1490, %v1489
    %v1553 = vpack.c.b16 %v1492, %v1491
    %v1554 = vpack.c.b16 %v1494, %v1493
    %v1555 = vpack.c.b16 %v1496, %v1495
    %v1556 = vpack.c.b16 %v1498, %v1497
    %v1557 = vpack.c.b16 %v1500, %v1499
    %v1558 = vpack.c.b16 %v1502, %v1501
    %v1559 = vpack.c.b16 %v1504, %v1503
    %v1560 = vpack.c.b16 %v1506, %v1505
    %v1561 = vpack.c.b16 %v1508, %v1507
    %v1562 = vpack.c.b16 %v1510, %v1509
    %v1563 = vpack.c.b16 %v1512, %v1511
    %v1564 = vpack.c.b16 %v1514, %v1513
    %v1565 = vpack.c.b16 %v1516, %v1515
    %v1566 = vpack.c.b16 %v1518, %v1517
    %v1567 = vpack.c.b16 %v1520, %v1519
    %v1568 = vpack.c.b16 %v1522, %v1521
    %v1569 = vpack.c.b16 %v1524, %v1523
    %v1570 = vpack.c.b16 %v1526, %v1525
    %v1571 = vpack.c.b16 %v1528, %v1527
    %v1572 = vpack.c.b16 %v1530, %v1529
    %v1573 = vpack.c.b16 %v1532, %v1531
    %v1574 = vpack.c.b16 %v1534, %v1533
    %v1575 = vpack.c.b16 %v1536, %v1535
    %v1576 = vpack.c.b16 %v1538, %v1537
    %v1577 = vpack.c.b16 %v1540, %v1539
    %v1578 = vpack.c.b16 %v1542, %v1541
    %v1616 = vsel %vm914, %v1322, 0
    %1618 = vmatpush.bf16.msra.mxu0 %v1550
    %1619 = vmatpush.bf16.msra.mxu0 %v1549
    %1620 = vmatpush.bf16.msra.mxu0 %v1548
    %1621 = vmatpush.bf16.msra.mxu0 %v1547
    %1622 = vmatpush.bf16.msra.mxu0 %v1546
    %1623 = vmatpush.bf16.msra.mxu0 %v1545
    %1624 = vmatpush.bf16.msra.mxu0 %v1544
    %1625 = vmatpush.bf16.msra.mxu0 %v1543
    %1626 = vmatmul.bf16.gmra.mxu0 %v1318
    %v1627 = vpop.f32.mrf.mxu0
    %v1628 = vadd.f32 %v1397, %v1627
    %v1629 = vpop.f32.mrf.mxu0
    %1630 = vdwg.mxu0
    %1631 = vmatpush.bf16.msra.mxu0 %v1558
    %1632 = vmatpush.bf16.msra.mxu0 %v1557
    %1633 = vmatpush.bf16.msra.mxu0 %v1556
    %1634 = vmatpush.bf16.msra.mxu0 %v1555
    %1635 = vmatpush.bf16.msra.mxu0 %v1554
    %1636 = vmatpush.bf16.msra.mxu0 %v1553
    %1637 = vmatpush.bf16.msra.mxu0 %v1552
    %1638 = vmatpush.bf16.msra.mxu0 %v1551
    %1639 = vmatmul.bf16.gmra.mxu0 %v1319
    %v1640 = vpop.f32.mrf.mxu0
    %v1641 = vadd.f32 %v1628, %v1640
    %v1642 = vpop.f32.mrf.mxu0
    %1643 = vdwg.mxu0
    %1644 = vmatpush.bf16.msra.mxu0 %v1566
    %1645 = vmatpush.bf16.msra.mxu0 %v1565
    %1646 = vmatpush.bf16.msra.mxu0 %v1564
    %1647 = vmatpush.bf16.msra.mxu0 %v1563
    %1648 = vmatpush.bf16.msra.mxu0 %v1562
    %1649 = vmatpush.bf16.msra.mxu0 %v1561
    %1650 = vmatpush.bf16.msra.mxu0 %v1560
    %1651 = vmatpush.bf16.msra.mxu0 %v1559
    %1652 = vmatmul.bf16.gmra.mxu0 %v1320
    %v1653 = vpop.f32.mrf.mxu0
    %v1654 = vadd.f32 %v1641, %v1653
    %v1655 = vpop.f32.mrf.mxu0
    %1656 = vdwg.mxu0
    %1657 = vmatpush.bf16.msra.mxu0 %v1574
    %1658 = vmatpush.bf16.msra.mxu0 %v1573
    %1659 = vmatpush.bf16.msra.mxu0 %v1572
    %1660 = vmatpush.bf16.msra.mxu0 %v1571
    %1661 = vmatpush.bf16.msra.mxu0 %v1570
    %1662 = vmatpush.bf16.msra.mxu0 %v1569
    %1663 = vmatpush.bf16.msra.mxu0 %v1568
    %1664 = vmatpush.bf16.msra.mxu0 %v1567
    %1665 = vmatmul.bf16.gmra.mxu0 %v1321
    %v1666 = vpop.f32.mrf.mxu0
    %v1667 = vadd.f32 %v1654, %v1666
    %v1668 = vpop.f32.mrf.mxu0
    %1669 = vdwg.mxu0
    %1670 = vmatpush.bf16.msra.mxu0 0
    %1671 = vmatpush.bf16.msra.mxu0 0
    %1672 = vmatpush.bf16.msra.mxu0 0
    %1673 = vmatpush.bf16.msra.mxu0 0
    %1674 = vmatpush.bf16.msra.mxu0 %v1578
    %1675 = vmatpush.bf16.msra.mxu0 %v1577
    %1676 = vmatpush.bf16.msra.mxu0 %v1576
    %1677 = vmatpush.bf16.msra.mxu0 %v1575
    %1678 = vmatmul.bf16.gmra.mxu0 %v1616
    %v1679 = vpop.f32.mrf.mxu0
    %v1680 = vadd.f32 %v1667, %v1679
    %v1681 = vpop.f32.mrf.mxu0
    %1682 = vdwg.mxu0
    %v1683 = vmax.f32 %v1680, 0.0
    %v1684 = vpack.c.bf16 %v1683, %v1683
    %v1685 = vld [vmem:[%s7] sm:$0xff]
    %v1686 = vld [vmem:[%s7 + $0x8] sm:$0xff]
    %v1687 = vld [vmem:[%s7 + $0x10] sm:$0xff]
    %v1688 = vld [vmem:[%s7 + $0x18] sm:$0xff]
    %v1689 = vld [vmem:[%s7 + $0x20] sm:$0xff]
    %v1690 = vld [vmem:[%s7 + $0x28] sm:$0xff]
    %v1691 = vld [vmem:[%s7 + $0x30] sm:$0xff]
    %v1692 = vld [vmem:[%s7 + $0x38] sm:$0xff]
    %v1693 = vld [vmem:[%s7 + $0x40] sm:$0xff]
    %v1694 = vld [vmem:[%s7 + $0x48] sm:$0xff]
    %v1695 = vld [vmem:[%s7 + $0x50] sm:$0xff]
    %v1696 = vld [vmem:[%s7 + $0x58] sm:$0xff]
    %v1697 = vld [vmem:[%s7 + $0x60] sm:$0xff]
    %v1698 = vld [vmem:[%s7 + $0x68] sm:$0xff]
    %v1699 = vld [vmem:[%s7 + $0x70] sm:$0xff]
    %v1700 = vld [vmem:[%s7 + $0x78] sm:$0xff]
    %v1701 = vld [vmem:[%s8] sm:$0xf]
    %v1703 = vperm.slane %v1701, 0
    %v1704 = vperm.slane %v1701, 1
    %v1705 = vperm.slane %v1701, 2
    %v1706 = vperm.slane %v1701, 3
    %v1727 = vunpack.c.l.b16 %v1685
    %v1728 = vunpack.c.h.b16 %v1685
    %v1729 = vunpack.c.l.b16 %v1686
    %v1730 = vunpack.c.h.b16 %v1686
    %v1731 = vunpack.c.l.b16 %v1687
    %v1732 = vunpack.c.h.b16 %v1687
    %v1733 = vunpack.c.l.b16 %v1688
    %v1734 = vunpack.c.h.b16 %v1688
    %v1735 = vunpack.c.l.b16 %v1689
    %v1736 = vunpack.c.h.b16 %v1689
    %v1737 = vunpack.c.l.b16 %v1690
    %v1738 = vunpack.c.h.b16 %v1690
    %v1739 = vunpack.c.l.b16 %v1691
    %v1740 = vunpack.c.h.b16 %v1691
    %v1741 = vunpack.c.l.b16 %v1692
    %v1742 = vunpack.c.h.b16 %v1692
    %v1743 = vunpack.c.l.b16 %v1693
    %v1744 = vunpack.c.h.b16 %v1693
    %v1745 = vunpack.c.l.b16 %v1694
    %v1746 = vunpack.c.h.b16 %v1694
    %v1747 = vunpack.c.l.b16 %v1695
    %v1748 = vunpack.c.h.b16 %v1695
    %v1749 = vunpack.c.l.b16 %v1696
    %v1750 = vunpack.c.h.b16 %v1696
    %v1751 = vunpack.c.l.b16 %v1697
    %v1752 = vunpack.c.h.b16 %v1697
    %v1753 = vunpack.c.l.b16 %v1698
    %v1754 = vunpack.c.h.b16 %v1698
    %v1755 = vunpack.c.l.b16 %v1699
    %v1756 = vunpack.c.h.b16 %v1699
    %v1757 = vunpack.c.l.b16 %v1700
    %v1758 = vunpack.c.h.b16 %v1700
    %v1759 = vpack.c.b16 %v1731, %v1727
    %v1760 = vpack.c.b16 %v1732, %v1728
    %v1761 = vpack.c.b16 %v1733, %v1729
    %v1762 = vpack.c.b16 %v1734, %v1730
    %v1763 = vpack.c.b16 %v1739, %v1735
    %v1764 = vpack.c.b16 %v1740, %v1736
    %v1765 = vpack.c.b16 %v1741, %v1737
    %v1766 = vpack.c.b16 %v1742, %v1738
    %v1767 = vpack.c.b16 %v1747, %v1743
    %v1768 = vpack.c.b16 %v1748, %v1744
    %v1769 = vpack.c.b16 %v1749, %v1745
    %v1770 = vpack.c.b16 %v1750, %v1746
    %v1771 = vpack.c.b16 %v1755, %v1751
    %v1772 = vpack.c.b16 %v1756, %v1752
    %v1773 = vpack.c.b16 %v1757, %v1753
    %v1774 = vpack.c.b16 %v1758, %v1754
    %v1792 = vsel %vm914, %v1684, 0
    %1794 = vmatpush.bf16.msra.mxu0 0
    %1795 = vmatpush.bf16.msra.mxu0 0
    %1796 = vmatpush.bf16.msra.mxu0 0
    %1797 = vmatpush.bf16.msra.mxu0 0
    %1798 = vmatpush.bf16.msra.mxu0 %v1771
    %1799 = vmatpush.bf16.msra.mxu0 %v1767
    %1800 = vmatpush.bf16.msra.mxu0 %v1763
    %1801 = vmatpush.bf16.msra.mxu0 %v1759
    %1802 = vmatmul.bf16.gmra.mxu0 %v1792
    %v1803 = vpop.f32.mrf.mxu0
    %v1804 = vadd.f32 %v1703, %v1803
    %v1805 = vpop.f32.mrf.mxu0
    %1806 = vdwg.mxu0
    %1807 = vmatpush.bf16.msra.mxu0 0
    %1808 = vmatpush.bf16.msra.mxu0 0
    %1809 = vmatpush.bf16.msra.mxu0 0
    %1810 = vmatpush.bf16.msra.mxu0 0
    %1811 = vmatpush.bf16.msra.mxu0 %v1772
    %1812 = vmatpush.bf16.msra.mxu0 %v1768
    %1813 = vmatpush.bf16.msra.mxu0 %v1764
    %1814 = vmatpush.bf16.msra.mxu0 %v1760
    %1815 = vmatmul.bf16.gmra.mxu0 %v1792
    %v1816 = vpop.f32.mrf.mxu0
    %v1817 = vadd.f32 %v1704, %v1816
    %v1818 = vpop.f32.mrf.mxu0
    %1819 = vdwg.mxu0
    %1820 = vmatpush.bf16.msra.mxu0 0
    %1821 = vmatpush.bf16.msra.mxu0 0
    %1822 = vmatpush.bf16.msra.mxu0 0
    %1823 = vmatpush.bf16.msra.mxu0 0
    %1824 = vmatpush.bf16.msra.mxu0 %v1773
    %1825 = vmatpush.bf16.msra.mxu0 %v1769
    %1826 = vmatpush.bf16.msra.mxu0 %v1765
    %1827 = vmatpush.bf16.msra.mxu0 %v1761
    %1828 = vmatmul.bf16.gmra.mxu0 %v1792
    %v1829 = vpop.f32.mrf.mxu0
    %v1830 = vadd.f32 %v1705, %v1829
    %v1831 = vpop.f32.mrf.mxu0
    %1832 = vdwg.mxu0
    %1833 = vmatpush.bf16.msra.mxu0 0
    %1834 = vmatpush.bf16.msra.mxu0 0
    %1835 = vmatpush.bf16.msra.mxu0 0
    %1836 = vmatpush.bf16.msra.mxu0 0
    %1837 = vmatpush.bf16.msra.mxu0 %v1774
    %1838 = vmatpush.bf16.msra.mxu0 %v1770
    %1839 = vmatpush.bf16.msra.mxu0 %v1766
    %1840 = vmatpush.bf16.msra.mxu0 %v1762
    %1841 = vmatmul.bf16.gmra.mxu0 %v1792
    %v1842 = vpop.f32.mrf.mxu0
    %v1843 = vadd.f32 %v1706, %v1842
    %v1844 = vpop.f32.mrf.mxu0
    %1845 = vdwg.mxu0
    %v1846 = vmax.f32 %v1804, 0.0
    %v1847 = vmax.f32 %v1817, 0.0
    %v1848 = vmax.f32 %v1830, 0.0
    %v1849 = vmax.f32 %v1843, 0.0
    %v1850 = vpack.c.bf16 %v1846, %v1846
    %v1851 = vpack.c.bf16 %v1847, %v1847
    %v1852 = vpack.c.bf16 %v1848, %v1848
    %v1853 = vpack.c.bf16 %v1849, %v1849
    %v1854 = vld [vmem:[%s9] sm:$0xf]
    %v1855 = vld [vmem:[%s9 + $0x4] sm:$0xf]
    %v1856 = vld [vmem:[%s9 + $0x8] sm:$0xf]
    %v1857 = vld [vmem:[%s9 + $0xc] sm:$0xf]
    %v1858 = vld [vmem:[%s9 + $0x10] sm:$0xf]
    %v1859 = vld [vmem:[%s9 + $0x14] sm:$0xf]
    %v1860 = vld [vmem:[%s9 + $0x18] sm:$0xf]
    %v1861 = vld [vmem:[%s9 + $0x1c] sm:$0xf]
    %v1862 = vld [vmem:[%s9 + $0x20] sm:$0xf]
    %v1863 = vld [vmem:[%s9 + $0x24] sm:$0xf]
    %v1864 = vld [vmem:[%s9 + $0x28] sm:$0xf]
    %v1865 = vld [vmem:[%s9 + $0x2c] sm:$0xf]
    %v1866 = vld [vmem:[%s9 + $0x30] sm:$0xf]
    %v1867 = vld [vmem:[%s9 + $0x34] sm:$0xf]
    %v1868 = vld [vmem:[%s9 + $0x38] sm:$0xf]
    %v1869 = vld [vmem:[%s9 + $0x3c] sm:$0xf]
    %v1870 = vld [vmem:[%s9 + $0x40] sm:$0xf]
    %v1871 = vld [vmem:[%s9 + $0x44] sm:$0xf]
    %v1872 = vld [vmem:[%s9 + $0x48] sm:$0xf]
    %v1873 = vld [vmem:[%s9 + $0x4c] sm:$0xf]
    %v1874 = vld [vmem:[%s9 + $0x50] sm:$0xf]
    %v1875 = vld [vmem:[%s9 + $0x54] sm:$0xf]
    %v1876 = vld [vmem:[%s9 + $0x58] sm:$0xf]
    %v1877 = vld [vmem:[%s9 + $0x5c] sm:$0xf]
    %v1878 = vld [vmem:[%s9 + $0x60] sm:$0xf]
    %v1879 = vld [vmem:[%s9 + $0x64] sm:$0xf]
    %v1880 = vld [vmem:[%s9 + $0x68] sm:$0xf]
    %v1881 = vld [vmem:[%s9 + $0x6c] sm:$0xf]
    %v1882 = vld [vmem:[%s9 + $0x70] sm:$0xf]
    %v1883 = vld [vmem:[%s9 + $0x74] sm:$0xf]
    %v1884 = vld [vmem:[%s9 + $0x78] sm:$0xf]
    %v1885 = vld [vmem:[%s9 + $0x7c] sm:$0xf]
    %v1886 = vld [vmem:[%s9 + $0x80] sm:$0xf]
    %v1887 = vld [vmem:[%s9 + $0x84] sm:$0xf]
    %v1888 = vld [vmem:[%s9 + $0x88] sm:$0xf]
    %v1889 = vld [vmem:[%s9 + $0x8c] sm:$0xf]
    %v1890 = vld [vmem:[%s9 + $0x90] sm:$0xf]
    %v1891 = vld [vmem:[%s9 + $0x94] sm:$0xf]
    %v1892 = vld [vmem:[%s9 + $0x98] sm:$0xf]
    %v1893 = vld [vmem:[%s9 + $0x9c] sm:$0xf]
    %v1894 = vld [vmem:[%s9 + $0xa0] sm:$0xf]
    %v1895 = vld [vmem:[%s9 + $0xa4] sm:$0xf]
    %v1896 = vld [vmem:[%s9 + $0xa8] sm:$0xf]
    %v1897 = vld [vmem:[%s9 + $0xac] sm:$0xf]
    %v1898 = vld [vmem:[%s9 + $0xb0] sm:$0xf]
    %v1899 = vld [vmem:[%s9 + $0xb4] sm:$0xf]
    %v1900 = vld [vmem:[%s9 + $0xb8] sm:$0xf]
    %v1901 = vld [vmem:[%s9 + $0xbc] sm:$0xf]
    %v1902 = vld [vmem:[%s9 + $0xc0] sm:$0xf]
    %v1903 = vld [vmem:[%s9 + $0xc4] sm:$0xf]
    %v1904 = vld [vmem:[%s9 + $0xc8] sm:$0xf]
    %v1905 = vld [vmem:[%s9 + $0xcc] sm:$0xf]
    %v1906 = vld [vmem:[%s9 + $0xd0] sm:$0xf]
    %v1907 = vld [vmem:[%s9 + $0xd4] sm:$0xf]
    %v1908 = vld [vmem:[%s9 + $0xd8] sm:$0xf]
    %v1909 = vld [vmem:[%s9 + $0xdc] sm:$0xf]
    %v1910 = vld [vmem:[%s9 + $0xe0] sm:$0xf]
    %v1911 = vld [vmem:[%s9 + $0xe4] sm:$0xf]
    %v1912 = vld [vmem:[%s9 + $0xe8] sm:$0xf]
    %v1913 = vld [vmem:[%s9 + $0xec] sm:$0xf]
    %v1914 = vld [vmem:[%s9 + $0xf0] sm:$0xf]
    %v1915 = vld [vmem:[%s9 + $0xf4] sm:$0xf]
    %v1916 = vld [vmem:[%s9 + $0xf8] sm:$0xf]
    %v1917 = vld [vmem:[%s9 + $0xfc] sm:$0xf]
    %v1918 = vld [vmem:[%s10] sm:$0x1]
    %v1920 = vperm.slane %v1918, 0
    %v1986 = vunpack.c.l.b16 %v1854
    %v1987 = vunpack.c.l.b16 %v1855
    %v1988 = vunpack.c.l.b16 %v1856
    %v1989 = vunpack.c.l.b16 %v1857
    %v1990 = vunpack.c.l.b16 %v1858
    %v1991 = vunpack.c.l.b16 %v1859
    %v1992 = vunpack.c.l.b16 %v1860
    %v1993 = vunpack.c.l.b16 %v1861
    %v1994 = vunpack.c.l.b16 %v1862
    %v1995 = vunpack.c.l.b16 %v1863
    %v1996 = vunpack.c.l.b16 %v1864
    %v1997 = vunpack.c.l.b16 %v1865
    %v1998 = vunpack.c.l.b16 %v1866
    %v1999 = vunpack.c.l.b16 %v1867
    %v2000 = vunpack.c.l.b16 %v1868
    %v2001 = vunpack.c.l.b16 %v1869
    %v2002 = vunpack.c.l.b16 %v1870
    %v2003 = vunpack.c.l.b16 %v1871
    %v2004 = vunpack.c.l.b16 %v1872
    %v2005 = vunpack.c.l.b16 %v1873
    %v2006 = vunpack.c.l.b16 %v1874
    %v2007 = vunpack.c.l.b16 %v1875
    %v2008 = vunpack.c.l.b16 %v1876
    %v2009 = vunpack.c.l.b16 %v1877
    %v2010 = vunpack.c.l.b16 %v1878
    %v2011 = vunpack.c.l.b16 %v1879
    %v2012 = vunpack.c.l.b16 %v1880
    %v2013 = vunpack.c.l.b16 %v1881
    %v2014 = vunpack.c.l.b16 %v1882
    %v2015 = vunpack.c.l.b16 %v1883
    %v2016 = vunpack.c.l.b16 %v1884
    %v2017 = vunpack.c.l.b16 %v1885
    %v2018 = vunpack.c.l.b16 %v1886
    %v2019 = vunpack.c.l.b16 %v1887
    %v2020 = vunpack.c.l.b16 %v1888
    %v2021 = vunpack.c.l.b16 %v1889
    %v2022 = vunpack.c.l.b16 %v1890
    %v2023 = vunpack.c.l.b16 %v1891
    %v2024 = vunpack.c.l.b16 %v1892
    %v2025 = vunpack.c.l.b16 %v1893
    %v2026 = vunpack.c.l.b16 %v1894
    %v2027 = vunpack.c.l.b16 %v1895
    %v2028 = vunpack.c.l.b16 %v1896
    %v2029 = vunpack.c.l.b16 %v1897
    %v2030 = vunpack.c.l.b16 %v1898
    %v2031 = vunpack.c.l.b16 %v1899
    %v2032 = vunpack.c.l.b16 %v1900
    %v2033 = vunpack.c.l.b16 %v1901
    %v2034 = vunpack.c.l.b16 %v1902
    %v2035 = vunpack.c.l.b16 %v1903
    %v2036 = vunpack.c.l.b16 %v1904
    %v2037 = vunpack.c.l.b16 %v1905
    %v2038 = vunpack.c.l.b16 %v1906
    %v2039 = vunpack.c.l.b16 %v1907
    %v2040 = vunpack.c.l.b16 %v1908
    %v2041 = vunpack.c.l.b16 %v1909
    %v2042 = vunpack.c.l.b16 %v1910
    %v2043 = vunpack.c.l.b16 %v1911
    %v2044 = vunpack.c.l.b16 %v1912
    %v2045 = vunpack.c.l.b16 %v1913
    %v2046 = vunpack.c.l.b16 %v1914
    %v2047 = vunpack.c.l.b16 %v1915
    %v2048 = vunpack.c.l.b16 %v1916
    %v2049 = vunpack.c.l.b16 %v1917
    %v2050 = vpack.c.b16 %v1987, %v1986
    %v2051 = vpack.c.b16 %v1989, %v1988
    %v2052 = vpack.c.b16 %v1991, %v1990
    %v2053 = vpack.c.b16 %v1993, %v1992
    %v2054 = vpack.c.b16 %v1995, %v1994
    %v2055 = vpack.c.b16 %v1997, %v1996
    %v2056 = vpack.c.b16 %v1999, %v1998
    %v2057 = vpack.c.b16 %v2001, %v2000
    %v2058 = vpack.c.b16 %v2003, %v2002
    %v2059 = vpack.c.b16 %v2005, %v2004
    %v2060 = vpack.c.b16 %v2007, %v2006
    %v2061 = vpack.c.b16 %v2009, %v2008
    %v2062 = vpack.c.b16 %v2011, %v2010
    %v2063 = vpack.c.b16 %v2013, %v2012
    %v2064 = vpack.c.b16 %v2015, %v2014
    %v2065 = vpack.c.b16 %v2017, %v2016
    %v2066 = vpack.c.b16 %v2019, %v2018
    %v2067 = vpack.c.b16 %v2021, %v2020
    %v2068 = vpack.c.b16 %v2023, %v2022
    %v2069 = vpack.c.b16 %v2025, %v2024
    %v2070 = vpack.c.b16 %v2027, %v2026
    %v2071 = vpack.c.b16 %v2029, %v2028
    %v2072 = vpack.c.b16 %v2031, %v2030
    %v2073 = vpack.c.b16 %v2033, %v2032
    %v2074 = vpack.c.b16 %v2035, %v2034
    %v2075 = vpack.c.b16 %v2037, %v2036
    %v2076 = vpack.c.b16 %v2039, %v2038
    %v2077 = vpack.c.b16 %v2041, %v2040
    %v2078 = vpack.c.b16 %v2043, %v2042
    %v2079 = vpack.c.b16 %v2045, %v2044
    %v2080 = vpack.c.b16 %v2047, %v2046
    %v2081 = vpack.c.b16 %v2049, %v2048
    %2114 = vmatpush.bf16.msra.mxu0 %v2057
    %2115 = vmatpush.bf16.msra.mxu0 %v2056
    %2116 = vmatpush.bf16.msra.mxu0 %v2055
    %2117 = vmatpush.bf16.msra.mxu0 %v2054
    %2118 = vmatpush.bf16.msra.mxu0 %v2053
    %2119 = vmatpush.bf16.msra.mxu0 %v2052
    %2120 = vmatpush.bf16.msra.mxu0 %v2051
    %2121 = vmatpush.bf16.msra.mxu0 %v2050
    %2122 = vmatmul.bf16.gmra.mxu0 %v1850
    %v2123 = vpop.f32.mrf.mxu0
    %v2124 = vadd.f32 %v1920, %v2123
    %v2125 = vpop.f32.mrf.mxu0
    %2126 = vdwg.mxu0
    %2127 = vmatpush.bf16.msra.mxu0 %v2065
    %2128 = vmatpush.bf16.msra.mxu0 %v2064
    %2129 = vmatpush.bf16.msra.mxu0 %v2063
    %2130 = vmatpush.bf16.msra.mxu0 %v2062
    %2131 = vmatpush.bf16.msra.mxu0 %v2061
    %2132 = vmatpush.bf16.msra.mxu0 %v2060
    %2133 = vmatpush.bf16.msra.mxu0 %v2059
    %2134 = vmatpush.bf16.msra.mxu0 %v2058
    %2135 = vmatmul.bf16.gmra.mxu0 %v1851
    %v2136 = vpop.f32.mrf.mxu0
    %v2137 = vadd.f32 %v2124, %v2136
    %v2138 = vpop.f32.mrf.mxu0
    %2139 = vdwg.mxu0
    %2140 = vmatpush.bf16.msra.mxu0 %v2073
    %2141 = vmatpush.bf16.msra.mxu0 %v2072
    %2142 = vmatpush.bf16.msra.mxu0 %v2071
    %2143 = vmatpush.bf16.msra.mxu0 %v2070
    %2144 = vmatpush.bf16.msra.mxu0 %v2069
    %2145 = vmatpush.bf16.msra.mxu0 %v2068
    %2146 = vmatpush.bf16.msra.mxu0 %v2067
    %2147 = vmatpush.bf16.msra.mxu0 %v2066
    %2148 = vmatmul.bf16.gmra.mxu0 %v1852
    %v2149 = vpop.f32.mrf.mxu0
    %v2150 = vadd.f32 %v2137, %v2149
    %v2151 = vpop.f32.mrf.mxu0
    %2152 = vdwg.mxu0
    %2153 = vmatpush.bf16.msra.mxu0 %v2081
    %2154 = vmatpush.bf16.msra.mxu0 %v2080
    %2155 = vmatpush.bf16.msra.mxu0 %v2079
    %2156 = vmatpush.bf16.msra.mxu0 %v2078
    %2157 = vmatpush.bf16.msra.mxu0 %v2077
    %2158 = vmatpush.bf16.msra.mxu0 %v2076
    %2159 = vmatpush.bf16.msra.mxu0 %v2075
    %2160 = vmatpush.bf16.msra.mxu0 %v2074
    %2161 = vmatmul.bf16.gmra.mxu0 %v1853
    %v2162 = vpop.f32.mrf.mxu0
    %v2163 = vadd.f32 %v2150, %v2162
    %v2164 = vpop.f32.mrf.mxu0
    %2165 = vdwg.mxu0
    %2166 = vst [vmem:[#allocation2] sm:$0x3] %v2163
    // Predicated region
    $region46: #{a3c_forward.1} parent=1 // pred_check
      _
    $region47: #{a3c_forward.1} parent=1 // pred_check_branch
      %2168 = sbr.rel (0) target = $region49
    $region48: #{a3c_forward.1} parent=1 // pred_region
      %2170 = vsyncadd [#allocation3], 0
      %s2172 = sshll.u32 [#allocation2], 4
      %s2173 = int_to_ptr.vmem [resolvable:$true] %s2172
      %s2174 = sshll.u32 %s11, 4
      %s2175 = int_to_ptr.hbm [resolvable:$true] %s2174
      %2177 = dma.vmem_to_hbm [thread:$0]  %s2173, 32, %s2175, [#allocation3]
    $region49: #{a3c_forward.1} parent=1 // pred_fallthru
      _
    // Predicated region
    $region50: #{a3c_forward.1} parent=1 // pred_check
      _
    $region51: #{a3c_forward.1} parent=1 // pred_check_branch
      %2179 = sbr.rel (0) target = $region53
    $region52: #{a3c_forward.1} parent=1 // pred_region
      %2181 = dma.done [#allocation3], 32
    $region53: #{a3c_forward.1} parent=1 // pred_fallthru
      _
    %2182 = vsyncpa [#allocation3], 1

</llo_original>
